<compile_context>
chip_gen: v7x
topology: tpu7x:2x2x1
jax: 0.10.0
libtpu: 0.0.40
codegen_flags: <defaults>
</compile_context>

<pallas_src>
import jax
import jax.numpy as jnp
from jax.experimental import pallas as pl
from jax.experimental.pallas import tpu as pltpu

_EPS = 1e-3  # nn.BatchNorm1d(out_channels, eps=0.001) in BasicFC


# --------------------------------------------------------------------------- #
# Kernels
# --------------------------------------------------------------------------- #
def _fc1_stats_kernel(x_ref, w1_ref, s_out, q_out, s_acc, q_acc):
    """P1: accumulate per-feature sum / sum-of-squares of h1 = x @ w1."""
    i = pl.program_id(0)

    @pl.when(i == 0)
    def _init():
        s_acc[...] = jnp.zeros_like(s_acc)
        q_acc[...] = jnp.zeros_like(q_acc)

    h1 = jnp.dot(x_ref[...], w1_ref[...], preferred_element_type=jnp.float32)
    s_acc[...] += jnp.sum(h1, axis=0, keepdims=True)
    q_acc[...] += jnp.sum(h1 * h1, axis=0, keepdims=True)

    @pl.when(i == pl.num_programs(0) - 1)
    def _finalize():
        s_out[...] = s_acc[...]
        q_out[...] = q_acc[...]


def _fc2_stats_kernel(x_ref, w1_ref, sc1_ref, sh1_ref, w2_ref,
                      h2_ref, s_out, q_out, s_acc, q_acc):
    """P2: recompute h1, BN1+ReLU, h2 = a1 @ w2; emit h2 and its (sum, sumsq)."""
    i = pl.program_id(0)

    @pl.when(i == 0)
    def _init():
        s_acc[...] = jnp.zeros_like(s_acc)
        q_acc[...] = jnp.zeros_like(q_acc)

    h1 = jnp.dot(x_ref[...], w1_ref[...], preferred_element_type=jnp.float32)
    a1 = jnp.maximum(h1 * sc1_ref[...] + sh1_ref[...], 0.0)  # BN1 + ReLU (f32)
    h2 = jnp.dot(a1.astype(w2_ref.dtype), w2_ref[...],
                 preferred_element_type=jnp.float32)
    h2_ref[...] = h2
    s_acc[...] += jnp.sum(h2, axis=0, keepdims=True)
    q_acc[...] += jnp.sum(h2 * h2, axis=0, keepdims=True)

    @pl.when(i == pl.num_programs(0) - 1)
    def _finalize():
        s_out[...] = s_acc[...]
        q_out[...] = q_acc[...]


def _bn_relu_kernel(h2_ref, sc2_ref, sh2_ref, out_ref):
    """P3: out = ReLU(h2 * scale + shift). Pure streaming, megacore-parallel."""
    out_ref[...] = jnp.maximum(h2_ref[...] * sc2_ref[...] + sh2_ref[...], 0.0)


# --------------------------------------------------------------------------- #
# Wrapper
# --------------------------------------------------------------------------- #
def _vmem_limit(bytes_needed):
    """Generation-aware scoped-VMEM cap: physical VMEM minus 16 MiB headroom."""
    try:
        info = pltpu.get_tpu_info()
        cap = int(getattr(info, "vmem_capacity_bytes", 64 * 1024 * 1024))
    except Exception:  # pragma: no cover - conservative fallback (v7x size)
        cap = 64 * 1024 * 1024
    headroom = 16 * 1024 * 1024
    return int(min(cap - headroom, max(32 * 1024 * 1024, int(bytes_needed))))


def _bn_scale_shift(s, q, n, gamma, beta, eps=_EPS):
    """Training-mode BN (biased var) folded into a single scale/shift pair."""
    inv_n = 1.0 / n
    mu = s * inv_n
    var = q * inv_n - mu * mu
    scale = gamma * jax.lax.rsqrt(var + eps)
    shift = beta - mu * scale
    return scale, shift


def prepare_params(params, matmul_dtype=jnp.bfloat16):
    """One-time param prep (hoisted out of the per-call path).

    Only the matmul weights are cast to the MXU input dtype (bf16 default on
    all generations: f32 accumulation, BN math stays f32).  Linear biases are
    intentionally dropped: training-mode BN cancels them exactly.
    """
    md = jnp.dtype(matmul_dtype)
    return {
        "w1": params["w1"].astype(md),
        "w2": params["w2"].astype(md),
        "g1": params["g1"].astype(jnp.float32),
        "be1": params["be1"].astype(jnp.float32),
        "g2": params["g2"].astype(jnp.float32),
        "be2": params["be2"].astype(jnp.float32),
    }


def textnet_forward(x, prepared, *, tile_batch=1024):
    """x: (B, 300) float32. prepared: dict from prepare_params()."""
    B, in_dim = x.shape
    hidden = prepared["w1"].shape[1]
    emb = prepared["w2"].shape[1]
    md = prepared["w1"].dtype
    msz = jnp.dtype(md).itemsize
    f32 = jnp.float32

    tb = min(int(tile_batch), B)
    nbt = -(-B // tb)          # ceil
    b_pad = nbt * tb

    xm = x.astype(md)
    if b_pad != B:
        # Zero rows are exact for the (bias-free) stats; their output rows are
        # sliced off at the end.
        xm = jnp.pad(xm, ((0, b_pad - B), (0, 0)))

    # BlockSpecs: x / h2 streamed per batch tile; weights & per-feature
    # vectors pinned resident via constant index_map (DMA'd once per call).
    x_spec = pl.BlockSpec((tb, in_dim), lambda i: (i, 0))
    w1_spec = pl.BlockSpec((in_dim, hidden), lambda i: (0, 0))
    w2_spec = pl.BlockSpec((hidden, emb), lambda i: (0, 0))
    vec_h = pl.BlockSpec((1, hidden), lambda i: (0, 0))
    vec_e = pl.BlockSpec((1, emb), lambda i: (0, 0))
    h2_spec = pl.BlockSpec((tb, emb), lambda i: (i, 0))

    # ---- P1: fc1 batch statistics ------------------------------------------
    vmem1 = (2 * tb * in_dim * msz + 2 * in_dim * hidden * msz
             + 2 * tb * hidden * 4 + 8 * hidden * 4 + (4 << 20))
    s1, q1 = pl.pallas_call(
        _fc1_stats_kernel,
        grid=(nbt,),
        in_specs=[x_spec, w1_spec],
        out_specs=(vec_h, vec_h),
        out_shape=(jax.ShapeDtypeStruct((1, hidden), f32),
                   jax.ShapeDtypeStruct((1, hidden), f32)),
        scratch_shapes=[pltpu.VMEM((1, hidden), f32),
                        pltpu.VMEM((1, hidden), f32)],
        compiler_params=pltpu.CompilerParams(
            dimension_semantics=("arbitrary",),
            vmem_limit_bytes=_vmem_limit(vmem1)),
        cost_estimate=pl.CostEstimate(
            flops=2 * b_pad * in_dim * hidden,
            transcendentals=0,
            bytes_accessed=b_pad * in_dim * msz + in_dim * hidden * msz
                           + 2 * hidden * 4),
    )(xm, prepared["w1"])

    scale1, shift1 = _bn_scale_shift(s1, q1, B, prepared["g1"], prepared["be1"])

    # ---- P2: BN1+ReLU, fc2, fc2 batch statistics ----------------------------
    vmem2 = (2 * tb * in_dim * msz + 2 * in_dim * hidden * msz
             + 2 * hidden * emb * msz + 3 * tb * hidden * 4
             + 2 * tb * emb * 4 + 8 * (hidden + emb) * 4 + (4 << 20))
    h2, s2, q2 = pl.pallas_call(
        _fc2_stats_kernel,
        grid=(nbt,),
        in_specs=[x_spec, w1_spec, vec_h, vec_h, w2_spec],
        out_specs=(h2_spec, vec_e, vec_e),
        out_shape=(jax.ShapeDtypeStruct((b_pad, emb), f32),
                   jax.ShapeDtypeStruct((1, emb), f32),
                   jax.ShapeDtypeStruct((1, emb), f32)),
        scratch_shapes=[pltpu.VMEM((1, emb), f32),
                        pltpu.VMEM((1, emb), f32)],
        compiler_params=pltpu.CompilerParams(
            dimension_semantics=("arbitrary",),
            vmem_limit_bytes=_vmem_limit(vmem2)),
        cost_estimate=pl.CostEstimate(
            flops=2 * b_pad * (in_dim * hidden + hidden * emb),
            transcendentals=0,
            bytes_accessed=b_pad * in_dim * msz + in_dim * hidden * msz
                           + hidden * emb * msz + b_pad * emb * 4),
    )(xm, prepared["w1"], scale1, shift1, prepared["w2"])

    scale2, shift2 = _bn_scale_shift(s2, q2, B, prepared["g2"], prepared["be2"])

    # ---- P3: BN2 + ReLU (elementwise; 'parallel' -> both TCs on v7x) --------
    vmem3 = 4 * tb * emb * 4 + 8 * emb * 4 + (2 << 20)
    out = pl.pallas_call(
        _bn_relu_kernel,
        grid=(nbt,),
        in_specs=[h2_spec, vec_e, vec_e],
        out_specs=h2_spec,
        out_shape=jax.ShapeDtypeStruct((b_pad, emb), f32),
        compiler_params=pltpu.CompilerParams(
            dimension_semantics=("parallel",),
            vmem_limit_bytes=_vmem_limit(vmem3)),
        cost_estimate=pl.CostEstimate(
            flops=3 * b_pad * emb,
            transcendentals=0,
            bytes_accessed=2 * b_pad * emb * 4),
    )(h2, scale2, shift2)

    return out[:B] if b_pad != B else out


# --------------------------------------------------------------------------- #
# Reference model + synthetic params
# --------------------------------------------------------------------------- #
def init_params(key, in_dim=300, hidden=512, emb=32):
    """PyTorch-style uniform fan-in init. b1/b2 kept for the reference only."""
    k1, k2, k3, k4 = jax.random.split(key, 4)
    bound1 = 1.0 / (in_dim ** 0.5)
    bound2 = 1.0 / (hidden ** 0.5)
    return {
        "w1": jax.random.uniform(k1, (in_dim, hidden), jnp.float32, -bound1, bound1),
        "b1": jax.random.uniform(k2, (1, hidden), jnp.float32, -bound1, bound1),
        "g1": jnp.ones((1, hidden), jnp.float32),
        "be1": jnp.zeros((1, hidden), jnp.float32),
        "w2": jax.random.uniform(k3, (hidden, emb), jnp.float32, -bound2, bound2),
        "b2": jax.random.uniform(k4, (1, emb), jnp.float32, -bound2, bound2),
        "g2": jnp.ones((1, emb), jnp.float32),
        "be2": jnp.zeros((1, emb), jnp.float32),
    }


def textnet_reference(x, p):
    """Pure-JAX f32 reference of the PyTorch forward (training-mode BN, biases)."""
    def bn_relu(h, g, b):
        mu = jnp.mean(h, axis=0, keepdims=True)
        var = jnp.mean((h - mu) ** 2, axis=0, keepdims=True)
        return jnp.maximum((h - mu) / jnp.sqrt(var + _EPS) * g + b, 0.0)
    h = bn_relu(x @ p["w1"] + p["b1"], p["g1"], p["be1"])
    return bn_relu(h @ p["w2"] + p["b2"], p["g2"], p["be2"])


if __name__ == "__main__":
    key = jax.random.PRNGKey(0)
    kx, kp = jax.random.split(key)

    # Small test config (embedding_dims = 32).  NOTE: at B=8 the call is
    # overhead-bound; batch to >=256 rows in production before tuning.
    B, IN_DIM, HIDDEN, EMB = 8, 300, 512, 32
    x = jax.random.normal(kx, (B, IN_DIM), jnp.float32)
    params = init_params(kp, in_dim=IN_DIM, hidden=HIDDEN, emb=EMB)
    ref = textnet_reference(x, params)

    fwd = jax.jit(textnet_forward)

    # f32 MXU path: algorithm-exactness check against the PyTorch-style ref.
    out_f32 = jax.block_until_ready(fwd(x, prepare_params(params, jnp.float32)))
    assert out_f32.shape == (B, EMB)
    assert jnp.allclose(out_f32, ref, atol=5e-4, rtol=5e-4), "f32 mismatch vs reference"

    # Default bf16 MXU path (all generations): only matmul rounding differs.
    out_bf16 = jax.block_until_ready(fwd(x, prepare_params(params)))
    assert out_bf16.shape == (B, EMB)
    assert float(jnp.max(jnp.abs(out_bf16 - ref))) < 0.1, "bf16 path sanity failed"

    print("KERNEL_OK")
</pallas_src>

<mosaic_0001>
module attributes {stable_mosaic.version = 11 : i64} {
  func.func @_fc1_stats_kernel(%arg0: i32, %arg1: memref<8x300xf32, #tpu.memory_space<vmem>>, %arg2: memref<300x512xf32, #tpu.memory_space<vmem>>, %arg3: memref<1x512xf32, #tpu.memory_space<vmem>>, %arg4: memref<1x512xf32, #tpu.memory_space<vmem>>, %arg5: memref<1x512xf32, #tpu.memory_space<vmem>>, %arg6: memref<1x512xf32, #tpu.memory_space<vmem>>) attributes {dimension_semantics = [#tpu.dimension_semantics<arbitrary>], iteration_bounds = array<i64: 1>, scalar_prefetch = 0 : i64, scratch_operands = 2 : i64, tpu.core_type = #tpu.core_type<tc>, window_params = [{transform_indices = @transform_0, window_bounds = array<i64: 8, 300>}, {pipeline_mode = #tpu.pipeline_mode<synchronous>, transform_indices = @transform_1, window_bounds = array<i64: 300, 512>}, {pipeline_mode = #tpu.pipeline_mode<synchronous>, transform_indices = @transform_2, window_bounds = array<i64: 1, 512>}, {pipeline_mode = #tpu.pipeline_mode<synchronous>, transform_indices = @transform_3, window_bounds = array<i64: 1, 512>}]} {
    %c0_i32 = arith.constant 0 : i32
    %0 = arith.cmpi eq, %arg0, %c0_i32 : i32
    %1 = arith.extui %0 : i1 to i32
    %c0_i32_0 = arith.constant 0 : i32
    %2 = arith.cmpi ne, %1, %c0_i32_0 : i32
    scf.if %2 {
      %cst_16 = arith.constant 0.000000e+00 : f32
      %20 = vector.broadcast %cst_16 : f32 to vector<1x512xf32>
      %c0_17 = arith.constant 0 : index
      %c0_18 = arith.constant 0 : index
      %21 = vector.load %arg5[%c0_17, %c0_18] : memref<1x512xf32, #tpu.memory_space<vmem>>, vector<1x512xf32>
      tpu.vector_store %arg5[%c0_17, %c0_18], %20 {strides = array<i32>} : memref<1x512xf32, #tpu.memory_space<vmem>>, vector<1x512xf32>,
      %cst_19 = arith.constant 0.000000e+00 : f32
      %22 = vector.broadcast %cst_19 : f32 to vector<1x512xf32>
      %c0_20 = arith.constant 0 : index
      %c0_21 = arith.constant 0 : index
      %23 = vector.load %arg6[%c0_20, %c0_21] : memref<1x512xf32, #tpu.memory_space<vmem>>, vector<1x512xf32>
      tpu.vector_store %arg6[%c0_20, %c0_21], %22 {strides = array<i32>} : memref<1x512xf32, #tpu.memory_space<vmem>>, vector<1x512xf32>,
    } else {
    }
    %c0 = arith.constant 0 : index
    %c0_1 = arith.constant 0 : index
    %3 = vector.load %arg1[%c0, %c0_1] : memref<8x300xf32, #tpu.memory_space<vmem>>, vector<8x300xf32>
    %c0_2 = arith.constant 0 : index
    %c0_3 = arith.constant 0 : index
    %4 = vector.load %arg2[%c0_2, %c0_3] : memref<300x512xf32, #tpu.memory_space<vmem>>, vector<300x512xf32>
    %cst = arith.constant dense<0.000000e+00> : vector<8x512xf32>
    %5 = tpu.matmul %3, %4, %cst {dimension_numbers = #tpu.dot_dimension_numbers<[1], [0], [0], [1], [0, 0, 1, 1], [], []>} : vector<8x300xf32>, vector<300x512xf32>, vector<8x512xf32> -> vector<8x512xf32>
    %c0_4 = arith.constant 0 : index
    %c0_5 = arith.constant 0 : index
    %6 = vector.load %arg5[%c0_4, %c0_5] : memref<1x512xf32, #tpu.memory_space<vmem>>, vector<1x512xf32>
    %cst_6 = arith.constant dense<0.000000e+00> : vector<512xf32>
    %7 = vector.multi_reduction <add>, %5, %cst_6 [0] : vector<8x512xf32> to vector<512xf32>
    %8 = vector.shape_cast %7 : vector<512xf32> to vector<1x512xf32>
    %9 = arith.addf %6, %8 : vector<1x512xf32>
    %c0_7 = arith.constant 0 : index
    %c0_8 = arith.constant 0 : index
    %10 = vector.load %arg5[%c0_7, %c0_8] : memref<1x512xf32, #tpu.memory_space<vmem>>, vector<1x512xf32>
    tpu.vector_store %arg5[%c0_7, %c0_8], %9 {strides = array<i32>} : memref<1x512xf32, #tpu.memory_space<vmem>>, vector<1x512xf32>,
    %c0_9 = arith.constant 0 : index
    %c0_10 = arith.constant 0 : index
    %11 = vector.load %arg6[%c0_9, %c0_10] : memref<1x512xf32, #tpu.memory_space<vmem>>, vector<1x512xf32>
    %12 = arith.mulf %5, %5 : vector<8x512xf32>
    %cst_11 = arith.constant dense<0.000000e+00> : vector<512xf32>
    %13 = vector.multi_reduction <add>, %12, %cst_11 [0] : vector<8x512xf32> to vector<512xf32>
    %14 = vector.shape_cast %13 : vector<512xf32> to vector<1x512xf32>
    %15 = arith.addf %11, %14 : vector<1x512xf32>
    %c0_12 = arith.constant 0 : index
    %c0_13 = arith.constant 0 : index
    %16 = vector.load %arg6[%c0_12, %c0_13] : memref<1x512xf32, #tpu.memory_space<vmem>>, vector<1x512xf32>
    tpu.vector_store %arg6[%c0_12, %c0_13], %15 {strides = array<i32>} : memref<1x512xf32, #tpu.memory_space<vmem>>, vector<1x512xf32>,
    %c0_i32_14 = arith.constant 0 : i32
    %17 = arith.cmpi eq, %arg0, %c0_i32_14 : i32
    %18 = arith.extui %17 : i1 to i32
    %c0_i32_15 = arith.constant 0 : i32
    %19 = arith.cmpi ne, %18, %c0_i32_15 : i32
    scf.if %19 {
      %c0_16 = arith.constant 0 : index
      %c0_17 = arith.constant 0 : index
      %20 = vector.load %arg5[%c0_16, %c0_17] : memref<1x512xf32, #tpu.memory_space<vmem>>, vector<1x512xf32>
      %c0_18 = arith.constant 0 : index
      %c0_19 = arith.constant 0 : index
      %21 = vector.load %arg3[%c0_18, %c0_19] : memref<1x512xf32, #tpu.memory_space<vmem>>, vector<1x512xf32>
      tpu.vector_store %arg3[%c0_18, %c0_19], %20 {strides = array<i32>} : memref<1x512xf32, #tpu.memory_space<vmem>>, vector<1x512xf32>,
      %c0_20 = arith.constant 0 : index
      %c0_21 = arith.constant 0 : index
      %22 = vector.load %arg6[%c0_20, %c0_21] : memref<1x512xf32, #tpu.memory_space<vmem>>, vector<1x512xf32>
      %c0_22 = arith.constant 0 : index
      %c0_23 = arith.constant 0 : index
      %23 = vector.load %arg4[%c0_22, %c0_23] : memref<1x512xf32, #tpu.memory_space<vmem>>, vector<1x512xf32>
      tpu.vector_store %arg4[%c0_22, %c0_23], %22 {strides = array<i32>} : memref<1x512xf32, #tpu.memory_space<vmem>>, vector<1x512xf32>,
    } else {
    }
    return
  }
  func.func @transform_0(%arg0: i32) -> (i32, i32) {
    %c0_i32 = arith.constant 0 : i32
    %c0_i32_0 = arith.constant 0 : i32
    return %arg0, %c0_i32 : i32, i32
  }
  func.func @transform_1(%arg0: i32) -> (i32, i32) {
    %c0_i32 = arith.constant 0 : i32
    %c0_i32_0 = arith.constant 0 : i32
    %c0_i32_1 = arith.constant 0 : i32
    return %c0_i32, %c0_i32_0 : i32, i32
  }
  func.func @transform_2(%arg0: i32) -> (i32, i32) {
    %c0_i32 = arith.constant 0 : i32
    %c0_i32_0 = arith.constant 0 : i32
    %c0_i32_1 = arith.constant 0 : i32
    return %c0_i32, %c0_i32_0 : i32, i32
  }
  func.func @transform_3(%arg0: i32) -> (i32, i32) {
    %c0_i32 = arith.constant 0 : i32
    %c0_i32_0 = arith.constant 0 : i32
    %c0_i32_1 = arith.constant 0 : i32
    return %c0_i32, %c0_i32_0 : i32, i32
  }
}

module attributes {stable_mosaic.version = 11 : i64} {
  func.func @_fc2_stats_kernel(%arg0: i32, %arg1: memref<8x300xf32, #tpu.memory_space<vmem>>, %arg2: memref<300x512xf32, #tpu.memory_space<vmem>>, %arg3: memref<1x512xf32, #tpu.memory_space<vmem>>, %arg4: memref<1x512xf32, #tpu.memory_space<vmem>>, %arg5: memref<512x32xf32, #tpu.memory_space<vmem>>, %arg6: memref<8x32xf32, #tpu.memory_space<vmem>>, %arg7: memref<1x32xf32, #tpu.memory_space<vmem>>, %arg8: memref<1x32xf32, #tpu.memory_space<vmem>>, %arg9: memref<1x32xf32, #tpu.memory_space<vmem>>, %arg10: memref<1x32xf32, #tpu.memory_space<vmem>>) attributes {dimension_semantics = [#tpu.dimension_semantics<arbitrary>], iteration_bounds = array<i64: 1>, scalar_prefetch = 0 : i64, scratch_operands = 2 : i64, tpu.core_type = #tpu.core_type<tc>, window_params = [{transform_indices = @transform_0, window_bounds = array<i64: 8, 300>}, {pipeline_mode = #tpu.pipeline_mode<synchronous>, transform_indices = @transform_1, window_bounds = array<i64: 300, 512>}, {pipeline_mode = #tpu.pipeline_mode<synchronous>, transform_indices = @transform_2, window_bounds = array<i64: 1, 512>}, {pipeline_mode = #tpu.pipeline_mode<synchronous>, transform_indices = @transform_3, window_bounds = array<i64: 1, 512>}, {pipeline_mode = #tpu.pipeline_mode<synchronous>, transform_indices = @transform_4, window_bounds = array<i64: 512, 32>}, {transform_indices = @transform_5, window_bounds = array<i64: 8, 32>}, {pipeline_mode = #tpu.pipeline_mode<synchronous>, transform_indices = @transform_6, window_bounds = array<i64: 1, 32>}, {pipeline_mode = #tpu.pipeline_mode<synchronous>, transform_indices = @transform_7, window_bounds = array<i64: 1, 32>}]} {
    %c0_i32 = arith.constant 0 : i32
    %0 = arith.cmpi eq, %arg0, %c0_i32 : i32
    %1 = arith.extui %0 : i1 to i32
    %c0_i32_0 = arith.constant 0 : i32
    %2 = arith.cmpi ne, %1, %c0_i32_0 : i32
    scf.if %2 {
      %cst_26 = arith.constant 0.000000e+00 : f32
      %31 = vector.broadcast %cst_26 : f32 to vector<1x32xf32>
      %c0_27 = arith.constant 0 : index
      %c0_28 = arith.constant 0 : index
      %32 = vector.load %arg9[%c0_27, %c0_28] : memref<1x32xf32, #tpu.memory_space<vmem>>, vector<1x32xf32>
      tpu.vector_store %arg9[%c0_27, %c0_28], %31 {strides = array<i32>} : memref<1x32xf32, #tpu.memory_space<vmem>>, vector<1x32xf32>,
      %cst_29 = arith.constant 0.000000e+00 : f32
      %33 = vector.broadcast %cst_29 : f32 to vector<1x32xf32>
      %c0_30 = arith.constant 0 : index
      %c0_31 = arith.constant 0 : index
      %34 = vector.load %arg10[%c0_30, %c0_31] : memref<1x32xf32, #tpu.memory_space<vmem>>, vector<1x32xf32>
      tpu.vector_store %arg10[%c0_30, %c0_31], %33 {strides = array<i32>} : memref<1x32xf32, #tpu.memory_space<vmem>>, vector<1x32xf32>,
    } else {
    }
    %c0 = arith.constant 0 : index
    %c0_1 = arith.constant 0 : index
    %3 = vector.load %arg1[%c0, %c0_1] : memref<8x300xf32, #tpu.memory_space<vmem>>, vector<8x300xf32>
    %c0_2 = arith.constant 0 : index
    %c0_3 = arith.constant 0 : index
    %4 = vector.load %arg2[%c0_2, %c0_3] : memref<300x512xf32, #tpu.memory_space<vmem>>, vector<300x512xf32>
    %cst = arith.constant dense<0.000000e+00> : vector<8x512xf32>
    %5 = tpu.matmul %3, %4, %cst {dimension_numbers = #tpu.dot_dimension_numbers<[1], [0], [0], [1], [0, 0, 1, 1], [], []>} : vector<8x300xf32>, vector<300x512xf32>, vector<8x512xf32> -> vector<8x512xf32>
    %c0_4 = arith.constant 0 : index
    %c0_5 = arith.constant 0 : index
    %6 = vector.load %arg3[%c0_4, %c0_5] : memref<1x512xf32, #tpu.memory_space<vmem>>, vector<1x512xf32>
    %7 = vector.broadcast %6 : vector<1x512xf32> to vector<8x512xf32>
    %8 = arith.mulf %5, %7 : vector<8x512xf32>
    %c0_6 = arith.constant 0 : index
    %c0_7 = arith.constant 0 : index
    %9 = vector.load %arg4[%c0_6, %c0_7] : memref<1x512xf32, #tpu.memory_space<vmem>>, vector<1x512xf32>
    %10 = vector.broadcast %9 : vector<1x512xf32> to vector<8x512xf32>
    %11 = arith.addf %8, %10 : vector<8x512xf32>
    %cst_8 = arith.constant 0.000000e+00 : f32
    %12 = vector.broadcast %cst_8 : f32 to vector<8x512xf32>
    %13 = arith.maximumf %11, %12 : vector<8x512xf32>
    %c0_9 = arith.constant 0 : index
    %c0_10 = arith.constant 0 : index
    %14 = vector.load %arg5[%c0_9, %c0_10] : memref<512x32xf32, #tpu.memory_space<vmem>>, vector<512x32xf32>
    %cst_11 = arith.constant dense<0.000000e+00> : vector<8x32xf32>
    %15 = tpu.matmul %13, %14, %cst_11 {dimension_numbers = #tpu.dot_dimension_numbers<[1], [0], [0], [1], [0, 0, 1, 1], [], []>} : vector<8x512xf32>, vector<512x32xf32>, vector<8x32xf32> -> vector<8x32xf32>
    %c0_12 = arith.constant 0 : index
    %c0_13 = arith.constant 0 : index
    %16 = vector.load %arg6[%c0_12, %c0_13] : memref<8x32xf32, #tpu.memory_space<vmem>>, vector<8x32xf32>
    tpu.vector_store %arg6[%c0_12, %c0_13], %15 {strides = array<i32>} : memref<8x32xf32, #tpu.memory_space<vmem>>, vector<8x32xf32>,
    %c0_14 = arith.constant 0 : index
    %c0_15 = arith.constant 0 : index
    %17 = vector.load %arg9[%c0_14, %c0_15] : memref<1x32xf32, #tpu.memory_space<vmem>>, vector<1x32xf32>
    %cst_16 = arith.constant dense<0.000000e+00> : vector<32xf32>
    %18 = vector.multi_reduction <add>, %15, %cst_16 [0] : vector<8x32xf32> to vector<32xf32>
    %19 = vector.shape_cast %18 : vector<32xf32> to vector<1x32xf32>
    %20 = arith.addf %17, %19 : vector<1x32xf32>
    %c0_17 = arith.constant 0 : index
    %c0_18 = arith.constant 0 : index
    %21 = vector.load %arg9[%c0_17, %c0_18] : memref<1x32xf32, #tpu.memory_space<vmem>>, vector<1x32xf32>
    tpu.vector_store %arg9[%c0_17, %c0_18], %20 {strides = array<i32>} : memref<1x32xf32, #tpu.memory_space<vmem>>, vector<1x32xf32>,
    %c0_19 = arith.constant 0 : index
    %c0_20 = arith.constant 0 : index
    %22 = vector.load %arg10[%c0_19, %c0_20] : memref<1x32xf32, #tpu.memory_space<vmem>>, vector<1x32xf32>
    %23 = arith.mulf %15, %15 : vector<8x32xf32>
    %cst_21 = arith.constant dense<0.000000e+00> : vector<32xf32>
    %24 = vector.multi_reduction <add>, %23, %cst_21 [0] : vector<8x32xf32> to vector<32xf32>
    %25 = vector.shape_cast %24 : vector<32xf32> to vector<1x32xf32>
    %26 = arith.addf %22, %25 : vector<1x32xf32>
    %c0_22 = arith.constant 0 : index
    %c0_23 = arith.constant 0 : index
    %27 = vector.load %arg10[%c0_22, %c0_23] : memref<1x32xf32, #tpu.memory_space<vmem>>, vector<1x32xf32>
    tpu.vector_store %arg10[%c0_22, %c0_23], %26 {strides = array<i32>} : memref<1x32xf32, #tpu.memory_space<vmem>>, vector<1x32xf32>,
    %c0_i32_24 = arith.constant 0 : i32
    %28 = arith.cmpi eq, %arg0, %c0_i32_24 : i32
    %29 = arith.extui %28 : i1 to i32
    %c0_i32_25 = arith.constant 0 : i32
    %30 = arith.cmpi ne, %29, %c0_i32_25 : i32
    scf.if %30 {
      %c0_26 = arith.constant 0 : index
      %c0_27 = arith.constant 0 : index
      %31 = vector.load %arg9[%c0_26, %c0_27] : memref<1x32xf32, #tpu.memory_space<vmem>>, vector<1x32xf32>
      %c0_28 = arith.constant 0 : index
      %c0_29 = arith.constant 0 : index
      %32 = vector.load %arg7[%c0_28, %c0_29] : memref<1x32xf32, #tpu.memory_space<vmem>>, vector<1x32xf32>
      tpu.vector_store %arg7[%c0_28, %c0_29], %31 {strides = array<i32>} : memref<1x32xf32, #tpu.memory_space<vmem>>, vector<1x32xf32>,
      %c0_30 = arith.constant 0 : index
      %c0_31 = arith.constant 0 : index
      %33 = vector.load %arg10[%c0_30, %c0_31] : memref<1x32xf32, #tpu.memory_space<vmem>>, vector<1x32xf32>
      %c0_32 = arith.constant 0 : index
      %c0_33 = arith.constant 0 : index
      %34 = vector.load %arg8[%c0_32, %c0_33] : memref<1x32xf32, #tpu.memory_space<vmem>>, vector<1x32xf32>
      tpu.vector_store %arg8[%c0_32, %c0_33], %33 {strides = array<i32>} : memref<1x32xf32, #tpu.memory_space<vmem>>, vector<1x32xf32>,
    } else {
    }
    return
  }
  func.func @transform_0(%arg0: i32) -> (i32, i32) {
    %c0_i32 = arith.constant 0 : i32
    %c0_i32_0 = arith.constant 0 : i32
    return %arg0, %c0_i32 : i32, i32
  }
  func.func @transform_1(%arg0: i32) -> (i32, i32) {
    %c0_i32 = arith.constant 0 : i32
    %c0_i32_0 = arith.constant 0 : i32
    %c0_i32_1 = arith.constant 0 : i32
    return %c0_i32, %c0_i32_0 : i32, i32
  }
  func.func @transform_2(%arg0: i32) -> (i32, i32) {
    %c0_i32 = arith.constant 0 : i32
    %c0_i32_0 = arith.constant 0 : i32
    %c0_i32_1 = arith.constant 0 : i32
    return %c0_i32, %c0_i32_0 : i32, i32
  }
  func.func @transform_3(%arg0: i32) -> (i32, i32) {
    %c0_i32 = arith.constant 0 : i32
    %c0_i32_0 = arith.constant 0 : i32
    %c0_i32_1 = arith.constant 0 : i32
    return %c0_i32, %c0_i32_0 : i32, i32
  }
  func.func @transform_4(%arg0: i32) -> (i32, i32) {
    %c0_i32 = arith.constant 0 : i32
    %c0_i32_0 = arith.constant 0 : i32
    %c0_i32_1 = arith.constant 0 : i32
    return %c0_i32, %c0_i32_0 : i32, i32
  }
  func.func @transform_5(%arg0: i32) -> (i32, i32) {
    %c0_i32 = arith.constant 0 : i32
    %c0_i32_0 = arith.constant 0 : i32
    return %arg0, %c0_i32 : i32, i32
  }
  func.func @transform_6(%arg0: i32) -> (i32, i32) {
    %c0_i32 = arith.constant 0 : i32
    %c0_i32_0 = arith.constant 0 : i32
    %c0_i32_1 = arith.constant 0 : i32
    return %c0_i32, %c0_i32_0 : i32, i32
  }
  func.func @transform_7(%arg0: i32) -> (i32, i32) {
    %c0_i32 = arith.constant 0 : i32
    %c0_i32_0 = arith.constant 0 : i32
    %c0_i32_1 = arith.constant 0 : i32
    return %c0_i32, %c0_i32_0 : i32, i32
  }
}

module attributes {stable_mosaic.version = 11 : i64} {
  func.func @_bn_relu_kernel(%arg0: i32, %arg1: memref<8x32xf32, #tpu.memory_space<vmem>>, %arg2: memref<1x32xf32, #tpu.memory_space<vmem>>, %arg3: memref<1x32xf32, #tpu.memory_space<vmem>>, %arg4: memref<8x32xf32, #tpu.memory_space<vmem>>) attributes {dimension_semantics = [#tpu.dimension_semantics<parallel>], iteration_bounds = array<i64: 1>, scalar_prefetch = 0 : i64, scratch_operands = 0 : i64, tpu.core_type = #tpu.core_type<tc>, window_params = [{transform_indices = @transform_0, window_bounds = array<i64: 8, 32>}, {pipeline_mode = #tpu.pipeline_mode<synchronous>, transform_indices = @transform_1, window_bounds = array<i64: 1, 32>}, {pipeline_mode = #tpu.pipeline_mode<synchronous>, transform_indices = @transform_2, window_bounds = array<i64: 1, 32>}, {transform_indices = @transform_3, window_bounds = array<i64: 8, 32>}]} {
    %c0 = arith.constant 0 : index
    %c0_0 = arith.constant 0 : index
    %0 = vector.load %arg1[%c0, %c0_0] : memref<8x32xf32, #tpu.memory_space<vmem>>, vector<8x32xf32>
    %c0_1 = arith.constant 0 : index
    %c0_2 = arith.constant 0 : index
    %1 = vector.load %arg2[%c0_1, %c0_2] : memref<1x32xf32, #tpu.memory_space<vmem>>, vector<1x32xf32>
    %2 = vector.broadcast %1 : vector<1x32xf32> to vector<8x32xf32>
    %3 = arith.mulf %0, %2 : vector<8x32xf32>
    %c0_3 = arith.constant 0 : index
    %c0_4 = arith.constant 0 : index
    %4 = vector.load %arg3[%c0_3, %c0_4] : memref<1x32xf32, #tpu.memory_space<vmem>>, vector<1x32xf32>
    %5 = vector.broadcast %4 : vector<1x32xf32> to vector<8x32xf32>
    %6 = arith.addf %3, %5 : vector<8x32xf32>
    %cst = arith.constant 0.000000e+00 : f32
    %7 = vector.broadcast %cst : f32 to vector<8x32xf32>
    %8 = arith.maximumf %6, %7 : vector<8x32xf32>
    %c0_5 = arith.constant 0 : index
    %c0_6 = arith.constant 0 : index
    %9 = vector.load %arg4[%c0_5, %c0_6] : memref<8x32xf32, #tpu.memory_space<vmem>>, vector<8x32xf32>
    tpu.vector_store %arg4[%c0_5, %c0_6], %8 {strides = array<i32>} : memref<8x32xf32, #tpu.memory_space<vmem>>, vector<8x32xf32>,
    return
  }
  func.func @transform_0(%arg0: i32) -> (i32, i32) {
    %c0_i32 = arith.constant 0 : i32
    %c0_i32_0 = arith.constant 0 : i32
    return %arg0, %c0_i32 : i32, i32
  }
  func.func @transform_1(%arg0: i32) -> (i32, i32) {
    %c0_i32 = arith.constant 0 : i32
    %c0_i32_0 = arith.constant 0 : i32
    %c0_i32_1 = arith.constant 0 : i32
    return %c0_i32, %c0_i32_0 : i32, i32
  }
  func.func @transform_2(%arg0: i32) -> (i32, i32) {
    %c0_i32 = arith.constant 0 : i32
    %c0_i32_0 = arith.constant 0 : i32
    %c0_i32_1 = arith.constant 0 : i32
    return %c0_i32, %c0_i32_0 : i32, i32
  }
  func.func @transform_3(%arg0: i32) -> (i32, i32) {
    %c0_i32 = arith.constant 0 : i32
    %c0_i32_0 = arith.constant 0 : i32
    return %arg0, %c0_i32 : i32, i32
  }
}

</mosaic_0001>

<llo_original>
// kernel: textnet_forward.5
$region0: #{textnet_forward.5}
  #allocation0 [shape = 'u32[]', space=smem, size = 0x4, offset = 0x4, fixed_abs, tag = 'smem constant byte address 0x4 - core index']
  #allocation1 [shape = 'u32[144,128]{1,0:T(1,128)}', space=vmem, size = 0x12000, scoped, tag = 'internal scratch']
  %s0 = inlined_call_operand.vmem [shape: f32[8,32], index: 0, kind: input, shape index: {}]
  %s1 = inlined_call_operand.vmem [shape: f32[1,32], index: 1, kind: input, shape index: {}]
  %s2 = inlined_call_operand.vmem [shape: f32[1,32], index: 2, kind: input, shape index: {}]
  %s3 = inlined_call_operand.hbm [shape: f32[8,32], index: 3, kind: output, shape index: {}]
  %s4 = sld [smem:[#allocation0]]
  $region22: #{textnet_forward.5} parent=0
    _
  %s6 = ssub.s32 1, %s4
  %s7 = scalar_select 0, %s6, %s4
  $region1: #{textnet_forward.5} parent=0
    #allocation2 [shape = 'u8[4096]{0}', space=vmem, size = 0x1000, scoped, tag = 'output window, operand 0, single buffered']
    #allocation3 [shape = 's32[1]{0}', space=sflag, size = 0x4, scoped, tag = 'scoped memory for textnet_forward.5']
    %8 = vsyncpa [#allocation3], 0
    // Predicated region
    $region2: #{textnet_forward.5} parent=1 // pred_check
      _
    $region3: #{textnet_forward.5} parent=1 // pred_check_branch
      %10 = sbr.rel (0) target = $region5
    $region4: #{textnet_forward.5} parent=1 // pred_region
      _
    $region5: #{textnet_forward.5} parent=1 // pred_fallthru
      _
    // Predicated region
    $region6: #{textnet_forward.5} parent=1 // pred_check
      _
    $region7: #{textnet_forward.5} parent=1 // pred_check_branch
      %12 = sbr.rel (0) target = $region9
    $region8: #{textnet_forward.5} parent=1 // pred_region
      _
    $region9: #{textnet_forward.5} parent=1 // pred_fallthru
      _
    // Predicated region
    $region10: #{textnet_forward.5} parent=1 // pred_check
      _
    $region11: #{textnet_forward.5} parent=1 // pred_check_branch
      %14 = sbr.rel (0) target = $region13
    $region12: #{textnet_forward.5} parent=1 // pred_region
      _
    $region13: #{textnet_forward.5} parent=1 // pred_fallthru
      _
    %v15 = vld [vmem:[%s0] sm:$0xff]
    %v16 = vld [vmem:[%s1] sm:$0x1]
    %v18 = vlaneseq
    %v19 = vshrl.u32 %v18, 7
    %v20 = vsub.s32 0, %v19
    %v21 = vrot.slane %v16, %v20
    %v23 = vmul.f32 %v15, %v21
    %v24 = vld [vmem:[%s2] sm:$0x1]
    %v26 = vlaneseq
    %v27 = vshrl.u32 %v26, 7
    %v28 = vsub.s32 0, %v27
    %v29 = vrot.slane %v24, %v28
    %v31 = vadd.f32 %v23, %v29
    %v32 = vmax.f32 %v31, 0.0
    %vm33 = vcmask 261120
    %34 = vst.msk [vmem:[#allocation2] sm:$0xff] %vm33, %v32
    // Predicated region
    $region14: #{textnet_forward.5} parent=1 // pred_check
      _
    $region15: #{textnet_forward.5} parent=1 // pred_check_branch
      %36 = sbr.rel (0) target = $region17
    $region16: #{textnet_forward.5} parent=1 // pred_region
      %s38 = ssub.s32 128, 128
      %39 = vsyncadd [#allocation3], %s38
      %s41 = sshll.u32 [#allocation2], 4
      %s42 = int_to_ptr.vmem [resolvable:$true] %s41
      %44 = dma.vmem_to_hbm [thread:$0]  %s42, 128, %s3, [#allocation3]
    $region17: #{textnet_forward.5} parent=1 // pred_fallthru
      _
    // Predicated region
    $region18: #{textnet_forward.5} parent=1 // pred_check
      _
    $region19: #{textnet_forward.5} parent=1 // pred_check_branch
      %46 = sbr.rel (0) target = $region21
    $region20: #{textnet_forward.5} parent=1 // pred_region
      %47 = dma.done [#allocation3], 128
    $region21: #{textnet_forward.5} parent=1 // pred_fallthru
      _
    %48 = vsyncpa [#allocation3], 1

// kernel: textnet_forward.3
$region0: #{textnet_forward.3}
  #allocation0 [shape = 'u32[]', space=smem, size = 0x4, offset = 0x4, fixed_abs, tag = 'smem constant byte address 0x4 - core index']
  #allocation1 [shape = 'u32[144,128]{1,0:T(1,128)}', space=vmem, size = 0x12000, scoped, tag = 'internal scratch']
  #allocation2 [shape = 'f32[1,512]{1,0:T(1,128)}', space=vmem, size = 0x800, scoped, tag = 'scratch operand']
  #allocation3 [shape = 'f32[1,512]{1,0:T(1,128)}', space=vmem, size = 0x800, scoped, tag = 'scratch operand']
  %s0 = inlined_call_operand.hbm [shape: f32[8,300], index: 0, kind: input, shape index: {}]
  %s1 = inlined_call_operand.hbm [shape: f32[300,512], index: 1, kind: input, shape index: {}]
  %s2 = inlined_call_operand.vmem [shape: f32[1,512], index: 2, kind: output, shape index: {0}]
  %s3 = inlined_call_operand.vmem [shape: f32[1,512], index: 3, kind: output, shape index: {1}]
  %4 = xla_tuple %s2, %s3
  %s5 = sld [smem:[#allocation0]]
  $region42: #{textnet_forward.3} parent=0
    _
  %s7 = ssub.s32 1, %s5
  %s8 = scalar_select 0, %s7, %s5
  $region1: #{textnet_forward.3} parent=0
    #allocation4 [shape = 'u8[12288]{0}', space=vmem, size = 0x3000, scoped, tag = 'input window, operand 0, single buffered']
    #allocation5 [shape = 's32[1]{0}', space=sflag, size = 0x4, scoped, tag = 'scoped memory for textnet_forward.3']
    #allocation6 [shape = 'u8[622592]{0}', space=vmem, size = 0x98000, scoped, tag = 'input window, operand 1, single buffered']
    #allocation7 [shape = 's32[1]{0}', space=sflag, size = 0x4, scoped, tag = 'scoped memory for textnet_forward.3']
    %9 = vsyncpa [#allocation5], 0
    %10 = vsyncpa [#allocation7], 0
    // Predicated region
    $region2: #{textnet_forward.3} parent=1 // pred_check
      _
    $region3: #{textnet_forward.3} parent=1 // pred_check_branch
      %12 = sbr.rel (0) target = $region5
    $region4: #{textnet_forward.3} parent=1 // pred_region
      %s14 = ssub.s32 384, 384
      %15 = vsyncadd [#allocation5], %s14
      %s17 = sshll.u32 [#allocation4], 4
      %s18 = int_to_ptr.vmem [resolvable:$true] %s17
      %20 = dma.hbm_to_vmem [thread:$0]  %s0, 384, %s18, [#allocation5]
    $region5: #{textnet_forward.3} parent=1 // pred_fallthru
      _
    // Predicated region
    $region6: #{textnet_forward.3} parent=1 // pred_check
      _
    $region7: #{textnet_forward.3} parent=1 // pred_check_branch
      %22 = sbr.rel (0) target = $region9
    $region8: #{textnet_forward.3} parent=1 // pred_region
      %s24 = ssub.s32 19456, 19456
      %25 = vsyncadd [#allocation7], %s24
      %s26 = sshll.u32 [#allocation6], 4
      %s27 = int_to_ptr.vmem [resolvable:$true] %s26
      %32 = dma.hbm_to_vmem [thread:$0]  %s1, 19456, %s27, [#allocation7], 512, 512, 32
    $region9: #{textnet_forward.3} parent=1 // pred_fallthru
      _
    // Predicated region
    $region10: #{textnet_forward.3} parent=1 // pred_check
      _
    $region11: #{textnet_forward.3} parent=1 // pred_check_branch
      %34 = sbr.rel (0) target = $region13
    $region12: #{textnet_forward.3} parent=1 // pred_region
      %35 = dma.done [#allocation5], 384
    $region13: #{textnet_forward.3} parent=1 // pred_fallthru
      _
    // Predicated region
    $region14: #{textnet_forward.3} parent=1 // pred_check
      _
    $region15: #{textnet_forward.3} parent=1 // pred_check_branch
      %37 = sbr.rel (0) target = $region17
    $region16: #{textnet_forward.3} parent=1 // pred_region
      %38 = dma.done [#allocation7], 19456
    $region17: #{textnet_forward.3} parent=1 // pred_fallthru
      _
    %p39 = scmp.eq.s32.totalorder 0, 0
    // Predicated region
    $region18: #{textnet_forward.3} parent=1 // pred_check
      %p40 = pneg %p39
    $region19: #{textnet_forward.3} parent=1 // pred_check_branch
      %42 = sbr.rel (%p40) target = $region21
    $region20: #{textnet_forward.3} parent=1 // pred_region
      %v43 = vlaneseq
      %vm44 = vcmp.ge.s32.totalorder %v43, 0
      %vm45 = vcmp.lt.s32.totalorder %v43, 512
      %vm46 = vmand %vm44, %vm45
      %47 = vst.msk [vmem:[#allocation2] sm:$0xf] %vm46, 0.0
      %48 = vst.msk [vmem:[#allocation3] sm:$0xf] %vm46, 0.0
    $region21: #{textnet_forward.3} parent=1 // pred_fallthru
      _
    %v49 = vld [vmem:[#allocation4] sm:$0xff]
    %v50 = vld [vmem:[#allocation4 + $0x8] sm:$0xff]
    %v51 = vld [vmem:[#allocation4 + $0x10] sm:$0xff]
    %v52 = vld [vmem:[#allocation6] sm:$0xff]
    %v53 = vld [vmem:[#allocation6 + $0x8] sm:$0xff]
    %v54 = vld [vmem:[#allocation6 + $0x10] sm:$0xff]
    %v55 = vld [vmem:[#allocation6 + $0x18] sm:$0xff]
    %v56 = vld [vmem:[#allocation6 + $0x20] sm:$0xff]
    %v57 = vld [vmem:[#allocation6 + $0x28] sm:$0xff]
    %v58 = vld [vmem:[#allocation6 + $0x30] sm:$0xff]
    %v59 = vld [vmem:[#allocation6 + $0x38] sm:$0xff]
    %v60 = vld [vmem:[#allocation6 + $0x40] sm:$0xff]
    %v61 = vld [vmem:[#allocation6 + $0x48] sm:$0xff]
    %v62 = vld [vmem:[#allocation6 + $0x50] sm:$0xff]
    %v63 = vld [vmem:[#allocation6 + $0x58] sm:$0xff]
    %v64 = vld [vmem:[#allocation6 + $0x60] sm:$0xff]
    %v65 = vld [vmem:[#allocation6 + $0x68] sm:$0xff]
    %v66 = vld [vmem:[#allocation6 + $0x70] sm:$0xff]
    %v67 = vld [vmem:[#allocation6 + $0x78] sm:$0xff]
    %v68 = vld [vmem:[#allocation6 + $0x80] sm:$0xff]
    %v69 = vld [vmem:[#allocation6 + $0x88] sm:$0xff]
    %v70 = vld [vmem:[#allocation6 + $0x90] sm:$0xff]
    %v71 = vld [vmem:[#allocation6 + $0x98] sm:$0xff]
    %v72 = vld [vmem:[#allocation6 + $0xa0] sm:$0xff]
    %v73 = vld [vmem:[#allocation6 + $0xa8] sm:$0xff]
    %v74 = vld [vmem:[#allocation6 + $0xb0] sm:$0xff]
    %v75 = vld [vmem:[#allocation6 + $0xb8] sm:$0xff]
    %v76 = vld [vmem:[#allocation6 + $0xc0] sm:$0xff]
    %v77 = vld [vmem:[#allocation6 + $0xc8] sm:$0xff]
    %v78 = vld [vmem:[#allocation6 + $0xd0] sm:$0xff]
    %v79 = vld [vmem:[#allocation6 + $0xd8] sm:$0xff]
    %v80 = vld [vmem:[#allocation6 + $0xe0] sm:$0xff]
    %v81 = vld [vmem:[#allocation6 + $0xe8] sm:$0xff]
    %v82 = vld [vmem:[#allocation6 + $0xf0] sm:$0xff]
    %v83 = vld [vmem:[#allocation6 + $0xf8] sm:$0xff]
    %v84 = vld [vmem:[#allocation6 + $0x100] sm:$0xff]
    %v85 = vld [vmem:[#allocation6 + $0x108] sm:$0xff]
    %v86 = vld [vmem:[#allocation6 + $0x110] sm:$0xff]
    %v87 = vld [vmem:[#allocation6 + $0x118] sm:$0xff]
    %v88 = vld [vmem:[#allocation6 + $0x120] sm:$0xff]
    %v89 = vld [vmem:[#allocation6 + $0x128] sm:$0xff]
    %v90 = vld [vmem:[#allocation6 + $0x130] sm:$0xff]
    %v91 = vld [vmem:[#allocation6 + $0x138] sm:$0xff]
    %v92 = vld [vmem:[#allocation6 + $0x140] sm:$0xff]
    %v93 = vld [vmem:[#allocation6 + $0x148] sm:$0xff]
    %v94 = vld [vmem:[#allocation6 + $0x150] sm:$0xff]
    %v95 = vld [vmem:[#allocation6 + $0x158] sm:$0xff]
    %v96 = vld [vmem:[#allocation6 + $0x160] sm:$0xff]
    %v97 = vld [vmem:[#allocation6 + $0x168] sm:$0xff]
    %v98 = vld [vmem:[#allocation6 + $0x170] sm:$0xff]
    %v99 = vld [vmem:[#allocation6 + $0x178] sm:$0xff]
    %v100 = vld [vmem:[#allocation6 + $0x180] sm:$0xff]
    %v101 = vld [vmem:[#allocation6 + $0x188] sm:$0xff]
    %v102 = vld [vmem:[#allocation6 + $0x190] sm:$0xff]
    %v103 = vld [vmem:[#allocation6 + $0x198] sm:$0xff]
    %v104 = vld [vmem:[#allocation6 + $0x1a0] sm:$0xff]
    %v105 = vld [vmem:[#allocation6 + $0x1a8] sm:$0xff]
    %v106 = vld [vmem:[#allocation6 + $0x1b0] sm:$0xff]
    %v107 = vld [vmem:[#allocation6 + $0x1b8] sm:$0xff]
    %v108 = vld [vmem:[#allocation6 + $0x1c0] sm:$0xff]
    %v109 = vld [vmem:[#allocation6 + $0x1c8] sm:$0xff]
    %v110 = vld [vmem:[#allocation6 + $0x1d0] sm:$0xff]
    %v111 = vld [vmem:[#allocation6 + $0x1d8] sm:$0xff]
    %v112 = vld [vmem:[#allocation6 + $0x1e0] sm:$0xff]
    %v113 = vld [vmem:[#allocation6 + $0x1e8] sm:$0xff]
    %v114 = vld [vmem:[#allocation6 + $0x1f0] sm:$0xff]
    %v115 = vld [vmem:[#allocation6 + $0x1f8] sm:$0xff]
    %v116 = vld [vmem:[#allocation6 + $0x200] sm:$0xff]
    %v117 = vld [vmem:[#allocation6 + $0x208] sm:$0xff]
    %v118 = vld [vmem:[#allocation6 + $0x210] sm:$0xff]
    %v119 = vld [vmem:[#allocation6 + $0x218] sm:$0xff]
    %v120 = vld [vmem:[#allocation6 + $0x220] sm:$0xff]
    %v121 = vld [vmem:[#allocation6 + $0x228] sm:$0xff]
    %v122 = vld [vmem:[#allocation6 + $0x230] sm:$0xff]
    %v123 = vld [vmem:[#allocation6 + $0x238] sm:$0xff]
    %v124 = vld [vmem:[#allocation6 + $0x240] sm:$0xff]
    %v125 = vld [vmem:[#allocation6 + $0x248] sm:$0xff]
    %v126 = vld [vmem:[#allocation6 + $0x250] sm:$0xff]
    %v127 = vld [vmem:[#allocation6 + $0x258] sm:$0xff]
    %v128 = vld [vmem:[#allocation6 + $0x260] sm:$0xff]
    %v129 = vld [vmem:[#allocation6 + $0x268] sm:$0xff]
    %v130 = vld [vmem:[#allocation6 + $0x270] sm:$0xff]
    %v131 = vld [vmem:[#allocation6 + $0x278] sm:$0xff]
    %v132 = vld [vmem:[#allocation6 + $0x280] sm:$0xff]
    %v133 = vld [vmem:[#allocation6 + $0x288] sm:$0xff]
    %v134 = vld [vmem:[#allocation6 + $0x290] sm:$0xff]
    %v135 = vld [vmem:[#allocation6 + $0x298] sm:$0xff]
    %v136 = vld [vmem:[#allocation6 + $0x2a0] sm:$0xff]
    %v137 = vld [vmem:[#allocation6 + $0x2a8] sm:$0xff]
    %v138 = vld [vmem:[#allocation6 + $0x2b0] sm:$0xff]
    %v139 = vld [vmem:[#allocation6 + $0x2b8] sm:$0xff]
    %v140 = vld [vmem:[#allocation6 + $0x2c0] sm:$0xff]
    %v141 = vld [vmem:[#allocation6 + $0x2c8] sm:$0xff]
    %v142 = vld [vmem:[#allocation6 + $0x2d0] sm:$0xff]
    %v143 = vld [vmem:[#allocation6 + $0x2d8] sm:$0xff]
    %v144 = vld [vmem:[#allocation6 + $0x2e0] sm:$0xff]
    %v145 = vld [vmem:[#allocation6 + $0x2e8] sm:$0xff]
    %v146 = vld [vmem:[#allocation6 + $0x2f0] sm:$0xff]
    %v147 = vld [vmem:[#allocation6 + $0x2f8] sm:$0xff]
    %v148 = vld [vmem:[#allocation6 + $0x300] sm:$0xff]
    %v149 = vld [vmem:[#allocation6 + $0x308] sm:$0xff]
    %v150 = vld [vmem:[#allocation6 + $0x310] sm:$0xff]
    %v151 = vld [vmem:[#allocation6 + $0x318] sm:$0xff]
    %v152 = vld [vmem:[#allocation6 + $0x320] sm:$0xff]
    %v153 = vld [vmem:[#allocation6 + $0x328] sm:$0xff]
    %v154 = vld [vmem:[#allocation6 + $0x330] sm:$0xff]
    %v155 = vld [vmem:[#allocation6 + $0x338] sm:$0xff]
    %v156 = vld [vmem:[#allocation6 + $0x340] sm:$0xff]
    %v157 = vld [vmem:[#allocation6 + $0x348] sm:$0xff]
    %v158 = vld [vmem:[#allocation6 + $0x350] sm:$0xff]
    %v159 = vld [vmem:[#allocation6 + $0x358] sm:$0xff]
    %v160 = vld [vmem:[#allocation6 + $0x360] sm:$0xff]
    %v161 = vld [vmem:[#allocation6 + $0x368] sm:$0xff]
    %v162 = vld [vmem:[#allocation6 + $0x370] sm:$0xff]
    %v163 = vld [vmem:[#allocation6 + $0x378] sm:$0xff]
    %v164 = vld [vmem:[#allocation6 + $0x380] sm:$0xff]
    %v165 = vld [vmem:[#allocation6 + $0x388] sm:$0xff]
    %v166 = vld [vmem:[#allocation6 + $0x390] sm:$0xff]
    %v167 = vld [vmem:[#allocation6 + $0x398] sm:$0xff]
    %v168 = vld [vmem:[#allocation6 + $0x3a0] sm:$0xff]
    %v169 = vld [vmem:[#allocation6 + $0x3a8] sm:$0xff]
    %v170 = vld [vmem:[#allocation6 + $0x3b0] sm:$0xff]
    %v171 = vld [vmem:[#allocation6 + $0x3b8] sm:$0xff]
    %v172 = vld [vmem:[#allocation6 + $0x3c0] sm:$0xff]
    %v173 = vld [vmem:[#allocation6 + $0x3c8] sm:$0xff]
    %v174 = vld [vmem:[#allocation6 + $0x3d0] sm:$0xff]
    %v175 = vld [vmem:[#allocation6 + $0x3d8] sm:$0xff]
    %v176 = vld [vmem:[#allocation6 + $0x3e0] sm:$0xff]
    %v177 = vld [vmem:[#allocation6 + $0x3e8] sm:$0xff]
    %v178 = vld [vmem:[#allocation6 + $0x3f0] sm:$0xff]
    %v179 = vld [vmem:[#allocation6 + $0x3f8] sm:$0xff]
    %v180 = vld [vmem:[#allocation6 + $0x400] sm:$0xff]
    %v181 = vld [vmem:[#allocation6 + $0x408] sm:$0xff]
    %v182 = vld [vmem:[#allocation6 + $0x410] sm:$0xff]
    %v183 = vld [vmem:[#allocation6 + $0x418] sm:$0xff]
    %v184 = vld [vmem:[#allocation6 + $0x420] sm:$0xff]
    %v185 = vld [vmem:[#allocation6 + $0x428] sm:$0xff]
    %v186 = vld [vmem:[#allocation6 + $0x430] sm:$0xff]
    %v187 = vld [vmem:[#allocation6 + $0x438] sm:$0xff]
    %v188 = vld [vmem:[#allocation6 + $0x440] sm:$0xff]
    %v189 = vld [vmem:[#allocation6 + $0x448] sm:$0xff]
    %v190 = vld [vmem:[#allocation6 + $0x450] sm:$0xff]
    %v191 = vld [vmem:[#allocation6 + $0x458] sm:$0xff]
    %v192 = vld [vmem:[#allocation6 + $0x460] sm:$0xff]
    %v193 = vld [vmem:[#allocation6 + $0x468] sm:$0xff]
    %v194 = vld [vmem:[#allocation6 + $0x470] sm:$0xff]
    %v195 = vld [vmem:[#allocation6 + $0x478] sm:$0xff]
    %v196 = vld [vmem:[#allocation6 + $0x480] sm:$0xff]
    %v197 = vld [vmem:[#allocation6 + $0x488] sm:$0xff]
    %v198 = vld [vmem:[#allocation6 + $0x490] sm:$0xff]
    %v199 = vld [vmem:[#allocation6 + $0x498] sm:$0xff]
    %v200 = vld [vmem:[#allocation6 + $0x4a0] sm:$0xf]
    %v201 = vld [vmem:[#allocation6 + $0x4a8] sm:$0xf]
    %v202 = vld [vmem:[#allocation6 + $0x4b0] sm:$0xf]
    %v203 = vld [vmem:[#allocation6 + $0x4b8] sm:$0xf]
    %vm204 = vcmask 359424
    %v206 = vsel %vm204, %v51, 0
    %vm208 = vcmask 1043456
    %v210 = vsel %vm208, %v200, 0
    %v213 = vsel %vm208, %v201, 0
    %v216 = vsel %vm208, %v202, 0
    %v219 = vsel %vm208, %v203, 0
    %221 = vmatprep.subr.mxu0 %v53
    %222 = vmatpush1.msra.mxu0 %v52
    %223 = vmatprep.subr.mxu0 %v57
    %224 = vmatpush1.msra.mxu0 %v56
    %225 = vmatprep.subr.mxu0 %v61
    %226 = vmatpush1.msra.mxu0 %v60
    %227 = vmatprep.subr.mxu0 %v65
    %228 = vmatpush1.msra.mxu0 %v64
    %229 = vmatprep.subr.mxu0 %v69
    %230 = vmatpush1.msra.mxu0 %v68
    %231 = vmatprep.subr.mxu0 %v73
    %232 = vmatpush1.msra.mxu0 %v72
    %233 = vmatprep.subr.mxu0 %v77
    %234 = vmatpush1.msra.mxu0 %v76
    %235 = vmatprep.subr.mxu0 %v81
    %236 = vmatpush1.msra.mxu0 %v80
    %237 = vmatprep.subr.mxu0 %v85
    %238 = vmatpush1.msra.mxu0 %v84
    %239 = vmatprep.subr.mxu0 %v89
    %240 = vmatpush1.msra.mxu0 %v88
    %241 = vmatprep.subr.mxu0 %v93
    %242 = vmatpush1.msra.mxu0 %v92
    %243 = vmatprep.subr.mxu0 %v97
    %244 = vmatpush1.msra.mxu0 %v96
    %245 = vmatprep.subr.mxu0 %v101
    %246 = vmatpush1.msra.mxu0 %v100
    %247 = vmatprep.subr.mxu0 %v105
    %248 = vmatpush1.msra.mxu0 %v104
    %249 = vmatprep.subr.mxu0 %v109
    %250 = vmatpush1.msra.mxu0 %v108
    %251 = vmatprep.subr.mxu0 %v113
    %252 = vmatpush1.msra.mxu0 %v112
    %253 = vmatprep.subr.mxu0 %v117
    %254 = vmatpush1.msra.mxu0 %v116
    %255 = vmatprep.subr.mxu0 %v121
    %256 = vmatpush1.msra.mxu0 %v120
    %257 = vmatprep.subr.mxu0 %v125
    %258 = vmatpush1.msra.mxu0 %v124
    %259 = vmatprep.subr.mxu0 %v129
    %260 = vmatpush1.msra.mxu0 %v128
    %261 = vmatprep.subr.mxu0 %v133
    %262 = vmatpush1.msra.mxu0 %v132
    %263 = vmatprep.subr.mxu0 %v137
    %264 = vmatpush1.msra.mxu0 %v136
    %265 = vmatprep.subr.mxu0 %v141
    %266 = vmatpush1.msra.mxu0 %v140
    %267 = vmatprep.subr.mxu0 %v145
    %268 = vmatpush1.msra.mxu0 %v144
    %269 = vmatprep.subr.mxu0 %v149
    %270 = vmatpush1.msra.mxu0 %v148
    %271 = vmatprep.subr.mxu0 %v153
    %272 = vmatpush1.msra.mxu0 %v152
    %273 = vmatprep.subr.mxu0 %v157
    %274 = vmatpush1.msra.mxu0 %v156
    %275 = vmatprep.subr.mxu0 %v161
    %276 = vmatpush1.msra.mxu0 %v160
    %277 = vmatprep.subr.mxu0 %v165
    %278 = vmatpush1.msra.mxu0 %v164
    %279 = vmatprep.subr.mxu0 %v169
    %280 = vmatpush1.msra.mxu0 %v168
    %281 = vmatprep.subr.mxu0 %v173
    %282 = vmatpush1.msra.mxu0 %v172
    %283 = vmatprep.subr.mxu0 %v177
    %284 = vmatpush1.msra.mxu0 %v176
    %285 = vmatprep.mubr.f32.mxu0 %v50
    %286 = vmatmul.mubr.f32.gmra.mrb[0].mxu0 %v49
    %v287 = vpop.f32.mrb[0].mxu0
    %v288 = vadd.f32 0.0, %v287
    %v289 = vpop.f32.mrb[0].mxu0
    %v290 = vadd.f32 0.0, %v289
    %291 = vdwg.mxu0
    %292 = vmatprep.subr.mxu0 %v181
    %293 = vmatpush1.msra.mxu0 %v180
    %294 = vmatprep.subr.mxu0 %v185
    %295 = vmatpush1.msra.mxu0 %v184
    %296 = vmatprep.subr.mxu0 %v189
    %297 = vmatpush1.msra.mxu0 %v188
    %298 = vmatprep.subr.mxu0 %v193
    %299 = vmatpush1.msra.mxu0 %v192
    %300 = vmatprep.subr.mxu0 %v197
    %301 = vmatpush1.msra.mxu0 %v196
    %302 = vmatprep.subr.mxu0 %v213
    %303 = vmatpush1.msra.mxu0 %v210
    %304 = vmatprep.subr.mxu0 0.0
    %305 = vmatpush1.msra.mxu0 0.0
    %306 = vmatprep.subr.mxu0 0.0
    %307 = vmatpush1.msra.mxu0 0.0
    %308 = vmatprep.subr.mxu0 0.0
    %309 = vmatpush1.msra.mxu0 0.0
    %310 = vmatprep.subr.mxu0 0.0
    %311 = vmatpush1.msra.mxu0 0.0
    %312 = vmatprep.subr.mxu0 0.0
    %313 = vmatpush1.msra.mxu0 0.0
    %314 = vmatprep.subr.mxu0 0.0
    %315 = vmatpush1.msra.mxu0 0.0
    %316 = vmatprep.subr.mxu0 0.0
    %317 = vmatpush1.msra.mxu0 0.0
    %318 = vmatprep.subr.mxu0 0.0
    %319 = vmatpush1.msra.mxu0 0.0
    %320 = vmatprep.subr.mxu0 0.0
    %321 = vmatpush1.msra.mxu0 0.0
    %322 = vmatprep.subr.mxu0 0.0
    %323 = vmatpush1.msra.mxu0 0.0
    %324 = vmatprep.subr.mxu0 0.0
    %325 = vmatpush1.msra.mxu0 0.0
    %326 = vmatprep.subr.mxu0 0.0
    %327 = vmatpush1.msra.mxu0 0.0
    %328 = vmatprep.subr.mxu0 0.0
    %329 = vmatpush1.msra.mxu0 0.0
    %330 = vmatprep.subr.mxu0 0.0
    %331 = vmatpush1.msra.mxu0 0.0
    %332 = vmatprep.subr.mxu0 0.0
    %333 = vmatpush1.msra.mxu0 0.0
    %334 = vmatprep.subr.mxu0 0.0
    %335 = vmatpush1.msra.mxu0 0.0
    %336 = vmatprep.subr.mxu0 0.0
    %337 = vmatpush1.msra.mxu0 0.0
    %338 = vmatprep.subr.mxu0 0.0
    %339 = vmatpush1.msra.mxu0 0.0
    %340 = vmatprep.subr.mxu0 0.0
    %341 = vmatpush1.msra.mxu0 0.0
    %342 = vmatprep.subr.mxu0 0.0
    %343 = vmatpush1.msra.mxu0 0.0
    %344 = vmatprep.subr.mxu0 0.0
    %345 = vmatpush1.msra.mxu0 0.0
    %346 = vmatprep.subr.mxu0 0.0
    %347 = vmatpush1.msra.mxu0 0.0
    %348 = vmatprep.subr.mxu0 0.0
    %349 = vmatpush1.msra.mxu0 0.0
    %350 = vmatprep.subr.mxu0 0.0
    %351 = vmatpush1.msra.mxu0 0.0
    %352 = vmatprep.subr.mxu0 0.0
    %353 = vmatpush1.msra.mxu0 0.0
    %354 = vmatprep.subr.mxu0 0.0
    %355 = vmatpush1.msra.mxu0 0.0
    %356 = vmatprep.mubr.f32.mxu0 0.0
    %357 = vmatmul.mubr.f32.gmra.mrb[0].mxu0 %v206
    %v358 = vpop.f32.mrb[0].mxu0
    %v359 = vadd.f32 %v288, %v358
    %v360 = vpop.f32.mrb[0].mxu0
    %v361 = vadd.f32 %v290, %v360
    %362 = vdwg.mxu0
    %363 = vmatprep.subr.mxu0 %v55
    %364 = vmatpush1.msra.mxu0 %v54
    %365 = vmatprep.subr.mxu0 %v59
    %366 = vmatpush1.msra.mxu0 %v58
    %367 = vmatprep.subr.mxu0 %v63
    %368 = vmatpush1.msra.mxu0 %v62
    %369 = vmatprep.subr.mxu0 %v67
    %370 = vmatpush1.msra.mxu0 %v66
    %371 = vmatprep.subr.mxu0 %v71
    %372 = vmatpush1.msra.mxu0 %v70
    %373 = vmatprep.subr.mxu0 %v75
    %374 = vmatpush1.msra.mxu0 %v74
    %375 = vmatprep.subr.mxu0 %v79
    %376 = vmatpush1.msra.mxu0 %v78
    %377 = vmatprep.subr.mxu0 %v83
    %378 = vmatpush1.msra.mxu0 %v82
    %379 = vmatprep.subr.mxu0 %v87
    %380 = vmatpush1.msra.mxu0 %v86
    %381 = vmatprep.subr.mxu0 %v91
    %382 = vmatpush1.msra.mxu0 %v90
    %383 = vmatprep.subr.mxu0 %v95
    %384 = vmatpush1.msra.mxu0 %v94
    %385 = vmatprep.subr.mxu0 %v99
    %386 = vmatpush1.msra.mxu0 %v98
    %387 = vmatprep.subr.mxu0 %v103
    %388 = vmatpush1.msra.mxu0 %v102
    %389 = vmatprep.subr.mxu0 %v107
    %390 = vmatpush1.msra.mxu0 %v106
    %391 = vmatprep.subr.mxu0 %v111
    %392 = vmatpush1.msra.mxu0 %v110
    %393 = vmatprep.subr.mxu0 %v115
    %394 = vmatpush1.msra.mxu0 %v114
    %395 = vmatprep.subr.mxu0 %v119
    %396 = vmatpush1.msra.mxu0 %v118
    %397 = vmatprep.subr.mxu0 %v123
    %398 = vmatpush1.msra.mxu0 %v122
    %399 = vmatprep.subr.mxu0 %v127
    %400 = vmatpush1.msra.mxu0 %v126
    %401 = vmatprep.subr.mxu0 %v131
    %402 = vmatpush1.msra.mxu0 %v130
    %403 = vmatprep.subr.mxu0 %v135
    %404 = vmatpush1.msra.mxu0 %v134
    %405 = vmatprep.subr.mxu0 %v139
    %406 = vmatpush1.msra.mxu0 %v138
    %407 = vmatprep.subr.mxu0 %v143
    %408 = vmatpush1.msra.mxu0 %v142
    %409 = vmatprep.subr.mxu0 %v147
    %410 = vmatpush1.msra.mxu0 %v146
    %411 = vmatprep.subr.mxu0 %v151
    %412 = vmatpush1.msra.mxu0 %v150
    %413 = vmatprep.subr.mxu0 %v155
    %414 = vmatpush1.msra.mxu0 %v154
    %415 = vmatprep.subr.mxu0 %v159
    %416 = vmatpush1.msra.mxu0 %v158
    %417 = vmatprep.subr.mxu0 %v163
    %418 = vmatpush1.msra.mxu0 %v162
    %419 = vmatprep.subr.mxu0 %v167
    %420 = vmatpush1.msra.mxu0 %v166
    %421 = vmatprep.subr.mxu0 %v171
    %422 = vmatpush1.msra.mxu0 %v170
    %423 = vmatprep.subr.mxu0 %v175
    %424 = vmatpush1.msra.mxu0 %v174
    %425 = vmatprep.subr.mxu0 %v179
    %426 = vmatpush1.msra.mxu0 %v178
    %427 = vmatprep.mubr.f32.mxu0 %v50
    %428 = vmatmul.mubr.f32.gmra.mrb[0].mxu0 %v49
    %v429 = vpop.f32.mrb[0].mxu0
    %v430 = vadd.f32 0.0, %v429
    %v431 = vpop.f32.mrb[0].mxu0
    %v432 = vadd.f32 0.0, %v431
    %433 = vdwg.mxu0
    %434 = vmatprep.subr.mxu0 %v183
    %435 = vmatpush1.msra.mxu0 %v182
    %436 = vmatprep.subr.mxu0 %v187
    %437 = vmatpush1.msra.mxu0 %v186
    %438 = vmatprep.subr.mxu0 %v191
    %439 = vmatpush1.msra.mxu0 %v190
    %440 = vmatprep.subr.mxu0 %v195
    %441 = vmatpush1.msra.mxu0 %v194
    %442 = vmatprep.subr.mxu0 %v199
    %443 = vmatpush1.msra.mxu0 %v198
    %444 = vmatprep.subr.mxu0 %v219
    %445 = vmatpush1.msra.mxu0 %v216
    %446 = vmatprep.subr.mxu0 0.0
    %447 = vmatpush1.msra.mxu0 0.0
    %448 = vmatprep.subr.mxu0 0.0
    %449 = vmatpush1.msra.mxu0 0.0
    %450 = vmatprep.subr.mxu0 0.0
    %451 = vmatpush1.msra.mxu0 0.0
    %452 = vmatprep.subr.mxu0 0.0
    %453 = vmatpush1.msra.mxu0 0.0
    %454 = vmatprep.subr.mxu0 0.0
    %455 = vmatpush1.msra.mxu0 0.0
    %456 = vmatprep.subr.mxu0 0.0
    %457 = vmatpush1.msra.mxu0 0.0
    %458 = vmatprep.subr.mxu0 0.0
    %459 = vmatpush1.msra.mxu0 0.0
    %460 = vmatprep.subr.mxu0 0.0
    %461 = vmatpush1.msra.mxu0 0.0
    %462 = vmatprep.subr.mxu0 0.0
    %463 = vmatpush1.msra.mxu0 0.0
    %464 = vmatprep.subr.mxu0 0.0
    %465 = vmatpush1.msra.mxu0 0.0
    %466 = vmatprep.subr.mxu0 0.0
    %467 = vmatpush1.msra.mxu0 0.0
    %468 = vmatprep.subr.mxu0 0.0
    %469 = vmatpush1.msra.mxu0 0.0
    %470 = vmatprep.subr.mxu0 0.0
    %471 = vmatpush1.msra.mxu0 0.0
    %472 = vmatprep.subr.mxu0 0.0
    %473 = vmatpush1.msra.mxu0 0.0
    %474 = vmatprep.subr.mxu0 0.0
    %475 = vmatpush1.msra.mxu0 0.0
    %476 = vmatprep.subr.mxu0 0.0
    %477 = vmatpush1.msra.mxu0 0.0
    %478 = vmatprep.subr.mxu0 0.0
    %479 = vmatpush1.msra.mxu0 0.0
    %480 = vmatprep.subr.mxu0 0.0
    %481 = vmatpush1.msra.mxu0 0.0
    %482 = vmatprep.subr.mxu0 0.0
    %483 = vmatpush1.msra.mxu0 0.0
    %484 = vmatprep.subr.mxu0 0.0
    %485 = vmatpush1.msra.mxu0 0.0
    %486 = vmatprep.subr.mxu0 0.0
    %487 = vmatpush1.msra.mxu0 0.0
    %488 = vmatprep.subr.mxu0 0.0
    %489 = vmatpush1.msra.mxu0 0.0
    %490 = vmatprep.subr.mxu0 0.0
    %491 = vmatpush1.msra.mxu0 0.0
    %492 = vmatprep.subr.mxu0 0.0
    %493 = vmatpush1.msra.mxu0 0.0
    %494 = vmatprep.subr.mxu0 0.0
    %495 = vmatpush1.msra.mxu0 0.0
    %496 = vmatprep.subr.mxu0 0.0
    %497 = vmatpush1.msra.mxu0 0.0
    %498 = vmatprep.mubr.f32.mxu0 0.0
    %499 = vmatmul.mubr.f32.gmra.mrb[0].mxu0 %v206
    %v500 = vpop.f32.mrb[0].mxu0
    %v501 = vadd.f32 %v430, %v500
    %v502 = vpop.f32.mrb[0].mxu0
    %v503 = vadd.f32 %v432, %v502
    %504 = vdwg.mxu0
    %v505 = vld [vmem:[#allocation2] sm:$0xf]
    %v506 = vrot.slane %v359, 4
    %v507 = vadd.f32 %v359, %v506
    %v508 = vrot.slane %v507, 2
    %v509 = vadd.f32 %v507, %v508
    %v510 = vrot.slane %v509, 1
    %v511 = vadd.f32 %v509, %v510
    %v512 = vrot.slane %v361, 4
    %v513 = vadd.f32 %v361, %v512
    %v514 = vrot.slane %v513, 2
    %v515 = vadd.f32 %v513, %v514
    %v516 = vrot.slane %v515, 1
    %v517 = vadd.f32 %v515, %v516
    %v518 = vrot.slane %v501, 4
    %v519 = vadd.f32 %v501, %v518
    %v520 = vrot.slane %v519, 2
    %v521 = vadd.f32 %v519, %v520
    %v522 = vrot.slane %v521, 1
    %v523 = vadd.f32 %v521, %v522
    %v524 = vrot.slane %v503, 4
    %v525 = vadd.f32 %v503, %v524
    %v526 = vrot.slane %v525, 2
    %v527 = vadd.f32 %v525, %v526
    %v528 = vrot.slane %v527, 1
    %v529 = vadd.f32 %v527, %v528
    %v534 = vcombine.low %v511, %v517
    %v535 = vcombine.low %v523, %v529
    %v537 = vunpack.c.l.s4 1966171168
    %v538 = vunpack.c.0.s8 %v537
    %v539 = vlaneseq
    %v540 = vshrl.u32 %v539, 7
    %v541 = vsub.s32 %v538, %v540
    %v542 = vrot.slane %v534, %v541
    %v544 = vunpack.c.l.s4 1966171168
    %v545 = vunpack.c.0.s8 %v544
    %v546 = vlaneseq
    %v547 = vshrl.u32 %v546, 7
    %v548 = vsub.s32 %v545, %v547
    %v549 = vrot.slane %v535, %v548
    %v550 = vcombine.low %v542, %v549
    %v552 = vunpack.c.l.s4 1966171168
    %v553 = vunpack.c.0.s8 %v552
    %v554 = vlaneseq
    %v555 = vshrl.u32 %v554, 7
    %v556 = vsub.s32 %v553, %v555
    %v557 = vrot.slane %v550, %v556
    %v559 = vadd.f32 %v505, %v557
    %v560 = vlaneseq
    %vm561 = vcmp.ge.s32.totalorder %v560, 0
    %vm562 = vcmp.lt.s32.totalorder %v560, 512
    %vm563 = vmand %vm561, %vm562
    %564 = vst.msk [vmem:[#allocation2] sm:$0xf] %vm563, %v559
    %v565 = vld [vmem:[#allocation3] sm:$0xf]
    %v566 = vmul.f32 %v359, %v359
    %v567 = vmul.f32 %v361, %v361
    %v568 = vmul.f32 %v501, %v501
    %v569 = vmul.f32 %v503, %v503
    %v570 = vrot.slane %v566, 4
    %v571 = vadd.f32 %v566, %v570
    %v572 = vrot.slane %v571, 2
    %v573 = vadd.f32 %v571, %v572
    %v574 = vrot.slane %v573, 1
    %v575 = vadd.f32 %v573, %v574
    %v576 = vrot.slane %v567, 4
    %v577 = vadd.f32 %v567, %v576
    %v578 = vrot.slane %v577, 2
    %v579 = vadd.f32 %v577, %v578
    %v580 = vrot.slane %v579, 1
    %v581 = vadd.f32 %v579, %v580
    %v582 = vrot.slane %v568, 4
    %v583 = vadd.f32 %v568, %v582
    %v584 = vrot.slane %v583, 2
    %v585 = vadd.f32 %v583, %v584
    %v586 = vrot.slane %v585, 1
    %v587 = vadd.f32 %v585, %v586
    %v588 = vrot.slane %v569, 4
    %v589 = vadd.f32 %v569, %v588
    %v590 = vrot.slane %v589, 2
    %v591 = vadd.f32 %v589, %v590
    %v592 = vrot.slane %v591, 1
    %v593 = vadd.f32 %v591, %v592
    %v598 = vcombine.low %v575, %v581
    %v599 = vcombine.low %v587, %v593
    %v601 = vunpack.c.l.s4 1966171168
    %v602 = vunpack.c.0.s8 %v601
    %v603 = vlaneseq
    %v604 = vshrl.u32 %v603, 7
    %v605 = vsub.s32 %v602, %v604
    %v606 = vrot.slane %v598, %v605
    %v608 = vunpack.c.l.s4 1966171168
    %v609 = vunpack.c.0.s8 %v608
    %v610 = vlaneseq
    %v611 = vshrl.u32 %v610, 7
    %v612 = vsub.s32 %v609, %v611
    %v613 = vrot.slane %v599, %v612
    %v614 = vcombine.low %v606, %v613
    %v616 = vunpack.c.l.s4 1966171168
    %v617 = vunpack.c.0.s8 %v616
    %v618 = vlaneseq
    %v619 = vshrl.u32 %v618, 7
    %v620 = vsub.s32 %v617, %v619
    %v621 = vrot.slane %v614, %v620
    %v623 = vadd.f32 %v565, %v621
    %624 = vst.msk [vmem:[#allocation3] sm:$0xf] %vm563, %v623
    // Predicated region
    $region22: #{textnet_forward.3} parent=1 // pred_check
      %p625 = pneg %p39
    $region23: #{textnet_forward.3} parent=1 // pred_check_branch
      %627 = sbr.rel (%p625) target = $region25
    $region24: #{textnet_forward.3} parent=1 // pred_region
      %v628 = vld [vmem:[#allocation2] sm:$0xf]
      %629 = vst.msk [vmem:[%s2] sm:$0xf] %vm563, %v628
      %v630 = vld [vmem:[#allocation3] sm:$0xf]
      %631 = vst.msk [vmem:[%s3] sm:$0xf] %vm563, %v630
    $region25: #{textnet_forward.3} parent=1 // pred_fallthru
      _
    // Predicated region
    $region26: #{textnet_forward.3} parent=1 // pred_check
      _
    $region27: #{textnet_forward.3} parent=1 // pred_check_branch
      %633 = sbr.rel (0) target = $region29
    $region28: #{textnet_forward.3} parent=1 // pred_region
      _
    $region29: #{textnet_forward.3} parent=1 // pred_fallthru
      _
    // Predicated region
    $region30: #{textnet_forward.3} parent=1 // pred_check
      _
    $region31: #{textnet_forward.3} parent=1 // pred_check_branch
      %635 = sbr.rel (0) target = $region33
    $region32: #{textnet_forward.3} parent=1 // pred_region
      _
    $region33: #{textnet_forward.3} parent=1 // pred_fallthru
      _
    // Predicated region
    $region34: #{textnet_forward.3} parent=1 // pred_check
      _
    $region35: #{textnet_forward.3} parent=1 // pred_check_branch
      %637 = sbr.rel (0) target = $region37
    $region36: #{textnet_forward.3} parent=1 // pred_region
      _
    $region37: #{textnet_forward.3} parent=1 // pred_fallthru
      _
    // Predicated region
    $region38: #{textnet_forward.3} parent=1 // pred_check
      _
    $region39: #{textnet_forward.3} parent=1 // pred_check_branch
      %639 = sbr.rel (0) target = $region41
    $region40: #{textnet_forward.3} parent=1 // pred_region
      _
    $region41: #{textnet_forward.3} parent=1 // pred_fallthru
      _
    %640 = vsyncpa [#allocation5], 1
    %641 = vsyncpa [#allocation7], 1

// kernel: textnet_forward.4
$region0: #{textnet_forward.4}
  #allocation0 [shape = 'u32[]', space=smem, size = 0x4, offset = 0x4, fixed_abs, tag = 'smem constant byte address 0x4 - core index']
  #allocation1 [shape = 'u32[144,128]{1,0:T(1,128)}', space=vmem, size = 0x12000, scoped, tag = 'internal scratch']
  #allocation2 [shape = 'f32[1,32]{1,0:T(1,128)}', space=vmem, size = 0x200, scoped, tag = 'scratch operand']
  #allocation3 [shape = 'f32[1,32]{1,0:T(1,128)}', space=vmem, size = 0x200, scoped, tag = 'scratch operand']
  %s0 = inlined_call_operand.vmem [shape: f32[8,300], index: 0, kind: input, shape index: {}]
  %s1 = inlined_call_operand.vmem [shape: f32[300,512], index: 1, kind: input, shape index: {}]
  %s2 = inlined_call_operand.vmem [shape: f32[1,512], index: 2, kind: input, shape index: {}]
  %s3 = inlined_call_operand.vmem [shape: f32[1,512], index: 3, kind: input, shape index: {}]
  %s4 = inlined_call_operand.vmem [shape: f32[512,32], index: 4, kind: input, shape index: {}]
  %s5 = inlined_call_operand.vmem [shape: f32[8,32], index: 5, kind: output, shape index: {0}]
  %s6 = inlined_call_operand.vmem [shape: f32[1,32], index: 6, kind: output, shape index: {1}]
  %s7 = inlined_call_operand.vmem [shape: f32[1,32], index: 7, kind: output, shape index: {2}]
  %8 = xla_tuple %s5, %s6, %s7
  %s9 = sld [smem:[#allocation0]]
  $region54: #{textnet_forward.4} parent=0
    _
  %s11 = ssub.s32 1, %s9
  %s12 = scalar_select 0, %s11, %s9
  // Predicated region
  $region2: #{textnet_forward.4} parent=0 // pred_check
    _
  $region3: #{textnet_forward.4} parent=0 // pred_check_branch
    %14 = sbr.rel (0) target = $region5
  $region4: #{textnet_forward.4} parent=0 // pred_region
    _
  $region5: #{textnet_forward.4} parent=0 // pred_fallthru
    _
  // Predicated region
  $region6: #{textnet_forward.4} parent=0 // pred_check
    _
  $region7: #{textnet_forward.4} parent=0 // pred_check_branch
    %16 = sbr.rel (0) target = $region9
  $region8: #{textnet_forward.4} parent=0 // pred_region
    _
  $region9: #{textnet_forward.4} parent=0 // pred_fallthru
    _
  // Predicated region
  $region10: #{textnet_forward.4} parent=0 // pred_check
    _
  $region11: #{textnet_forward.4} parent=0 // pred_check_branch
    %18 = sbr.rel (0) target = $region13
  $region12: #{textnet_forward.4} parent=0 // pred_region
    _
  $region13: #{textnet_forward.4} parent=0 // pred_fallthru
    _
  // Predicated region
  $region14: #{textnet_forward.4} parent=0 // pred_check
    _
  $region15: #{textnet_forward.4} parent=0 // pred_check_branch
    %20 = sbr.rel (0) target = $region17
  $region16: #{textnet_forward.4} parent=0 // pred_region
    _
  $region17: #{textnet_forward.4} parent=0 // pred_fallthru
    _
  // Predicated region
  $region18: #{textnet_forward.4} parent=0 // pred_check
    _
  $region19: #{textnet_forward.4} parent=0 // pred_check_branch
    %22 = sbr.rel (0) target = $region21
  $region20: #{textnet_forward.4} parent=0 // pred_region
    _
  $region21: #{textnet_forward.4} parent=0 // pred_fallthru
    _
  %p23 = scmp.eq.s32.totalorder 0, 0
  // Predicated region
  $region22: #{textnet_forward.4} parent=0 // pred_check
    %p24 = pneg %p23
  $region23: #{textnet_forward.4} parent=0 // pred_check_branch
    %26 = sbr.rel (%p24) target = $region25
  $region24: #{textnet_forward.4} parent=0 // pred_region
    %vm27 = vcmask 253952
    %28 = vst.msk [vmem:[#allocation2] sm:$0x1] %vm27, 0.0
    %29 = vst.msk [vmem:[#allocation3] sm:$0x1] %vm27, 0.0
  $region25: #{textnet_forward.4} parent=0 // pred_fallthru
    _
  %v30 = vld [vmem:[%s0] sm:$0xff]
  %v31 = vld [vmem:[%s0 + $0x8] sm:$0xff]
  %v32 = vld [vmem:[%s0 + $0x10] sm:$0xff]
  %v33 = vld [vmem:[%s1] sm:$0xff]
  %v34 = vld [vmem:[%s1 + $0x8] sm:$0xff]
  %v35 = vld [vmem:[%s1 + $0x10] sm:$0xff]
  %v36 = vld [vmem:[%s1 + $0x18] sm:$0xff]
  %v37 = vld [vmem:[%s1 + $0x20] sm:$0xff]
  %v38 = vld [vmem:[%s1 + $0x28] sm:$0xff]
  %v39 = vld [vmem:[%s1 + $0x30] sm:$0xff]
  %v40 = vld [vmem:[%s1 + $0x38] sm:$0xff]
  %v41 = vld [vmem:[%s1 + $0x40] sm:$0xff]
  %v42 = vld [vmem:[%s1 + $0x48] sm:$0xff]
  %v43 = vld [vmem:[%s1 + $0x50] sm:$0xff]
  %v44 = vld [vmem:[%s1 + $0x58] sm:$0xff]
  %v45 = vld [vmem:[%s1 + $0x60] sm:$0xff]
  %v46 = vld [vmem:[%s1 + $0x68] sm:$0xff]
  %v47 = vld [vmem:[%s1 + $0x70] sm:$0xff]
  %v48 = vld [vmem:[%s1 + $0x78] sm:$0xff]
  %v49 = vld [vmem:[%s1 + $0x80] sm:$0xff]
  %v50 = vld [vmem:[%s1 + $0x88] sm:$0xff]
  %v51 = vld [vmem:[%s1 + $0x90] sm:$0xff]
  %v52 = vld [vmem:[%s1 + $0x98] sm:$0xff]
  %v53 = vld [vmem:[%s1 + $0xa0] sm:$0xff]
  %v54 = vld [vmem:[%s1 + $0xa8] sm:$0xff]
  %v55 = vld [vmem:[%s1 + $0xb0] sm:$0xff]
  %v56 = vld [vmem:[%s1 + $0xb8] sm:$0xff]
  %v57 = vld [vmem:[%s1 + $0xc0] sm:$0xff]
  %v58 = vld [vmem:[%s1 + $0xc8] sm:$0xff]
  %v59 = vld [vmem:[%s1 + $0xd0] sm:$0xff]
  %v60 = vld [vmem:[%s1 + $0xd8] sm:$0xff]
  %v61 = vld [vmem:[%s1 + $0xe0] sm:$0xff]
  %v62 = vld [vmem:[%s1 + $0xe8] sm:$0xff]
  %v63 = vld [vmem:[%s1 + $0xf0] sm:$0xff]
  %v64 = vld [vmem:[%s1 + $0xf8] sm:$0xff]
  %v65 = vld [vmem:[%s1 + $0x100] sm:$0xff]
  %v66 = vld [vmem:[%s1 + $0x108] sm:$0xff]
  %v67 = vld [vmem:[%s1 + $0x110] sm:$0xff]
  %v68 = vld [vmem:[%s1 + $0x118] sm:$0xff]
  %v69 = vld [vmem:[%s1 + $0x120] sm:$0xff]
  %v70 = vld [vmem:[%s1 + $0x128] sm:$0xff]
  %v71 = vld [vmem:[%s1 + $0x130] sm:$0xff]
  %v72 = vld [vmem:[%s1 + $0x138] sm:$0xff]
  %v73 = vld [vmem:[%s1 + $0x140] sm:$0xff]
  %v74 = vld [vmem:[%s1 + $0x148] sm:$0xff]
  %v75 = vld [vmem:[%s1 + $0x150] sm:$0xff]
  %v76 = vld [vmem:[%s1 + $0x158] sm:$0xff]
  %v77 = vld [vmem:[%s1 + $0x160] sm:$0xff]
  %v78 = vld [vmem:[%s1 + $0x168] sm:$0xff]
  %v79 = vld [vmem:[%s1 + $0x170] sm:$0xff]
  %v80 = vld [vmem:[%s1 + $0x178] sm:$0xff]
  %v81 = vld [vmem:[%s1 + $0x180] sm:$0xff]
  %v82 = vld [vmem:[%s1 + $0x188] sm:$0xff]
  %v83 = vld [vmem:[%s1 + $0x190] sm:$0xff]
  %v84 = vld [vmem:[%s1 + $0x198] sm:$0xff]
  %v85 = vld [vmem:[%s1 + $0x1a0] sm:$0xff]
  %v86 = vld [vmem:[%s1 + $0x1a8] sm:$0xff]
  %v87 = vld [vmem:[%s1 + $0x1b0] sm:$0xff]
  %v88 = vld [vmem:[%s1 + $0x1b8] sm:$0xff]
  %v89 = vld [vmem:[%s1 + $0x1c0] sm:$0xff]
  %v90 = vld [vmem:[%s1 + $0x1c8] sm:$0xff]
  %v91 = vld [vmem:[%s1 + $0x1d0] sm:$0xff]
  %v92 = vld [vmem:[%s1 + $0x1d8] sm:$0xff]
  %v93 = vld [vmem:[%s1 + $0x1e0] sm:$0xff]
  %v94 = vld [vmem:[%s1 + $0x1e8] sm:$0xff]
  %v95 = vld [vmem:[%s1 + $0x1f0] sm:$0xff]
  %v96 = vld [vmem:[%s1 + $0x1f8] sm:$0xff]
  %v97 = vld [vmem:[%s1 + $0x200] sm:$0xff]
  %v98 = vld [vmem:[%s1 + $0x208] sm:$0xff]
  %v99 = vld [vmem:[%s1 + $0x210] sm:$0xff]
  %v100 = vld [vmem:[%s1 + $0x218] sm:$0xff]
  %v101 = vld [vmem:[%s1 + $0x220] sm:$0xff]
  %v102 = vld [vmem:[%s1 + $0x228] sm:$0xff]
  %v103 = vld [vmem:[%s1 + $0x230] sm:$0xff]
  %v104 = vld [vmem:[%s1 + $0x238] sm:$0xff]
  %v105 = vld [vmem:[%s1 + $0x240] sm:$0xff]
  %v106 = vld [vmem:[%s1 + $0x248] sm:$0xff]
  %v107 = vld [vmem:[%s1 + $0x250] sm:$0xff]
  %v108 = vld [vmem:[%s1 + $0x258] sm:$0xff]
  %v109 = vld [vmem:[%s1 + $0x260] sm:$0xff]
  %v110 = vld [vmem:[%s1 + $0x268] sm:$0xff]
  %v111 = vld [vmem:[%s1 + $0x270] sm:$0xff]
  %v112 = vld [vmem:[%s1 + $0x278] sm:$0xff]
  %v113 = vld [vmem:[%s1 + $0x280] sm:$0xff]
  %v114 = vld [vmem:[%s1 + $0x288] sm:$0xff]
  %v115 = vld [vmem:[%s1 + $0x290] sm:$0xff]
  %v116 = vld [vmem:[%s1 + $0x298] sm:$0xff]
  %v117 = vld [vmem:[%s1 + $0x2a0] sm:$0xff]
  %v118 = vld [vmem:[%s1 + $0x2a8] sm:$0xff]
  %v119 = vld [vmem:[%s1 + $0x2b0] sm:$0xff]
  %v120 = vld [vmem:[%s1 + $0x2b8] sm:$0xff]
  %v121 = vld [vmem:[%s1 + $0x2c0] sm:$0xff]
  %v122 = vld [vmem:[%s1 + $0x2c8] sm:$0xff]
  %v123 = vld [vmem:[%s1 + $0x2d0] sm:$0xff]
  %v124 = vld [vmem:[%s1 + $0x2d8] sm:$0xff]
  %v125 = vld [vmem:[%s1 + $0x2e0] sm:$0xff]
  %v126 = vld [vmem:[%s1 + $0x2e8] sm:$0xff]
  %v127 = vld [vmem:[%s1 + $0x2f0] sm:$0xff]
  %v128 = vld [vmem:[%s1 + $0x2f8] sm:$0xff]
  %v129 = vld [vmem:[%s1 + $0x300] sm:$0xff]
  %v130 = vld [vmem:[%s1 + $0x308] sm:$0xff]
  %v131 = vld [vmem:[%s1 + $0x310] sm:$0xff]
  %v132 = vld [vmem:[%s1 + $0x318] sm:$0xff]
  %v133 = vld [vmem:[%s1 + $0x320] sm:$0xff]
  %v134 = vld [vmem:[%s1 + $0x328] sm:$0xff]
  %v135 = vld [vmem:[%s1 + $0x330] sm:$0xff]
  %v136 = vld [vmem:[%s1 + $0x338] sm:$0xff]
  %v137 = vld [vmem:[%s1 + $0x340] sm:$0xff]
  %v138 = vld [vmem:[%s1 + $0x348] sm:$0xff]
  %v139 = vld [vmem:[%s1 + $0x350] sm:$0xff]
  %v140 = vld [vmem:[%s1 + $0x358] sm:$0xff]
  %v141 = vld [vmem:[%s1 + $0x360] sm:$0xff]
  %v142 = vld [vmem:[%s1 + $0x368] sm:$0xff]
  %v143 = vld [vmem:[%s1 + $0x370] sm:$0xff]
  %v144 = vld [vmem:[%s1 + $0x378] sm:$0xff]
  %v145 = vld [vmem:[%s1 + $0x380] sm:$0xff]
  %v146 = vld [vmem:[%s1 + $0x388] sm:$0xff]
  %v147 = vld [vmem:[%s1 + $0x390] sm:$0xff]
  %v148 = vld [vmem:[%s1 + $0x398] sm:$0xff]
  %v149 = vld [vmem:[%s1 + $0x3a0] sm:$0xff]
  %v150 = vld [vmem:[%s1 + $0x3a8] sm:$0xff]
  %v151 = vld [vmem:[%s1 + $0x3b0] sm:$0xff]
  %v152 = vld [vmem:[%s1 + $0x3b8] sm:$0xff]
  %v153 = vld [vmem:[%s1 + $0x3c0] sm:$0xff]
  %v154 = vld [vmem:[%s1 + $0x3c8] sm:$0xff]
  %v155 = vld [vmem:[%s1 + $0x3d0] sm:$0xff]
  %v156 = vld [vmem:[%s1 + $0x3d8] sm:$0xff]
  %v157 = vld [vmem:[%s1 + $0x3e0] sm:$0xff]
  %v158 = vld [vmem:[%s1 + $0x3e8] sm:$0xff]
  %v159 = vld [vmem:[%s1 + $0x3f0] sm:$0xff]
  %v160 = vld [vmem:[%s1 + $0x3f8] sm:$0xff]
  %v161 = vld [vmem:[%s1 + $0x400] sm:$0xff]
  %v162 = vld [vmem:[%s1 + $0x408] sm:$0xff]
  %v163 = vld [vmem:[%s1 + $0x410] sm:$0xff]
  %v164 = vld [vmem:[%s1 + $0x418] sm:$0xff]
  %v165 = vld [vmem:[%s1 + $0x420] sm:$0xff]
  %v166 = vld [vmem:[%s1 + $0x428] sm:$0xff]
  %v167 = vld [vmem:[%s1 + $0x430] sm:$0xff]
  %v168 = vld [vmem:[%s1 + $0x438] sm:$0xff]
  %v169 = vld [vmem:[%s1 + $0x440] sm:$0xff]
  %v170 = vld [vmem:[%s1 + $0x448] sm:$0xff]
  %v171 = vld [vmem:[%s1 + $0x450] sm:$0xff]
  %v172 = vld [vmem:[%s1 + $0x458] sm:$0xff]
  %v173 = vld [vmem:[%s1 + $0x460] sm:$0xff]
  %v174 = vld [vmem:[%s1 + $0x468] sm:$0xff]
  %v175 = vld [vmem:[%s1 + $0x470] sm:$0xff]
  %v176 = vld [vmem:[%s1 + $0x478] sm:$0xff]
  %v177 = vld [vmem:[%s1 + $0x480] sm:$0xff]
  %v178 = vld [vmem:[%s1 + $0x488] sm:$0xff]
  %v179 = vld [vmem:[%s1 + $0x490] sm:$0xff]
  %v180 = vld [vmem:[%s1 + $0x498] sm:$0xff]
  %v181 = vld [vmem:[%s1 + $0x4a0] sm:$0xf]
  %v182 = vld [vmem:[%s1 + $0x4a8] sm:$0xf]
  %v183 = vld [vmem:[%s1 + $0x4b0] sm:$0xf]
  %v184 = vld [vmem:[%s1 + $0x4b8] sm:$0xf]
  %vm185 = vcmask 359424
  %v187 = vsel %vm185, %v32, 0
  %vm189 = vcmask 1043456
  %v191 = vsel %vm189, %v181, 0
  %v194 = vsel %vm189, %v182, 0
  %v197 = vsel %vm189, %v183, 0
  %v200 = vsel %vm189, %v184, 0
  %202 = vmatprep.subr.mxu0 %v34
  %203 = vmatpush1.msra.mxu0 %v33
  %204 = vmatprep.subr.mxu0 %v38
  %205 = vmatpush1.msra.mxu0 %v37
  %206 = vmatprep.subr.mxu0 %v42
  %207 = vmatpush1.msra.mxu0 %v41
  %208 = vmatprep.subr.mxu0 %v46
  %209 = vmatpush1.msra.mxu0 %v45
  %210 = vmatprep.subr.mxu0 %v50
  %211 = vmatpush1.msra.mxu0 %v49
  %212 = vmatprep.subr.mxu0 %v54
  %213 = vmatpush1.msra.mxu0 %v53
  %214 = vmatprep.subr.mxu0 %v58
  %215 = vmatpush1.msra.mxu0 %v57
  %216 = vmatprep.subr.mxu0 %v62
  %217 = vmatpush1.msra.mxu0 %v61
  %218 = vmatprep.subr.mxu0 %v66
  %219 = vmatpush1.msra.mxu0 %v65
  %220 = vmatprep.subr.mxu0 %v70
  %221 = vmatpush1.msra.mxu0 %v69
  %222 = vmatprep.subr.mxu0 %v74
  %223 = vmatpush1.msra.mxu0 %v73
  %224 = vmatprep.subr.mxu0 %v78
  %225 = vmatpush1.msra.mxu0 %v77
  %226 = vmatprep.subr.mxu0 %v82
  %227 = vmatpush1.msra.mxu0 %v81
  %228 = vmatprep.subr.mxu0 %v86
  %229 = vmatpush1.msra.mxu0 %v85
  %230 = vmatprep.subr.mxu0 %v90
  %231 = vmatpush1.msra.mxu0 %v89
  %232 = vmatprep.subr.mxu0 %v94
  %233 = vmatpush1.msra.mxu0 %v93
  %234 = vmatprep.subr.mxu0 %v98
  %235 = vmatpush1.msra.mxu0 %v97
  %236 = vmatprep.subr.mxu0 %v102
  %237 = vmatpush1.msra.mxu0 %v101
  %238 = vmatprep.subr.mxu0 %v106
  %239 = vmatpush1.msra.mxu0 %v105
  %240 = vmatprep.subr.mxu0 %v110
  %241 = vmatpush1.msra.mxu0 %v109
  %242 = vmatprep.subr.mxu0 %v114
  %243 = vmatpush1.msra.mxu0 %v113
  %244 = vmatprep.subr.mxu0 %v118
  %245 = vmatpush1.msra.mxu0 %v117
  %246 = vmatprep.subr.mxu0 %v122
  %247 = vmatpush1.msra.mxu0 %v121
  %248 = vmatprep.subr.mxu0 %v126
  %249 = vmatpush1.msra.mxu0 %v125
  %250 = vmatprep.subr.mxu0 %v130
  %251 = vmatpush1.msra.mxu0 %v129
  %252 = vmatprep.subr.mxu0 %v134
  %253 = vmatpush1.msra.mxu0 %v133
  %254 = vmatprep.subr.mxu0 %v138
  %255 = vmatpush1.msra.mxu0 %v137
  %256 = vmatprep.subr.mxu0 %v142
  %257 = vmatpush1.msra.mxu0 %v141
  %258 = vmatprep.subr.mxu0 %v146
  %259 = vmatpush1.msra.mxu0 %v145
  %260 = vmatprep.subr.mxu0 %v150
  %261 = vmatpush1.msra.mxu0 %v149
  %262 = vmatprep.subr.mxu0 %v154
  %263 = vmatpush1.msra.mxu0 %v153
  %264 = vmatprep.subr.mxu0 %v158
  %265 = vmatpush1.msra.mxu0 %v157
  %266 = vmatprep.mubr.f32.mxu0 %v31
  %267 = vmatmul.mubr.f32.gmra.mrb[0].mxu0 %v30
  %v268 = vpop.f32.mrb[0].mxu0
  %v269 = vadd.f32 0.0, %v268
  %v270 = vpop.f32.mrb[0].mxu0
  %v271 = vadd.f32 0.0, %v270
  %272 = vdwg.mxu0
  %273 = vmatprep.subr.mxu0 %v162
  %274 = vmatpush1.msra.mxu0 %v161
  %275 = vmatprep.subr.mxu0 %v166
  %276 = vmatpush1.msra.mxu0 %v165
  %277 = vmatprep.subr.mxu0 %v170
  %278 = vmatpush1.msra.mxu0 %v169
  %279 = vmatprep.subr.mxu0 %v174
  %280 = vmatpush1.msra.mxu0 %v173
  %281 = vmatprep.subr.mxu0 %v178
  %282 = vmatpush1.msra.mxu0 %v177
  %283 = vmatprep.subr.mxu0 %v194
  %284 = vmatpush1.msra.mxu0 %v191
  %285 = vmatprep.subr.mxu0 0.0
  %286 = vmatpush1.msra.mxu0 0.0
  %287 = vmatprep.subr.mxu0 0.0
  %288 = vmatpush1.msra.mxu0 0.0
  %289 = vmatprep.subr.mxu0 0.0
  %290 = vmatpush1.msra.mxu0 0.0
  %291 = vmatprep.subr.mxu0 0.0
  %292 = vmatpush1.msra.mxu0 0.0
  %293 = vmatprep.subr.mxu0 0.0
  %294 = vmatpush1.msra.mxu0 0.0
  %295 = vmatprep.subr.mxu0 0.0
  %296 = vmatpush1.msra.mxu0 0.0
  %297 = vmatprep.subr.mxu0 0.0
  %298 = vmatpush1.msra.mxu0 0.0
  %299 = vmatprep.subr.mxu0 0.0
  %300 = vmatpush1.msra.mxu0 0.0
  %301 = vmatprep.subr.mxu0 0.0
  %302 = vmatpush1.msra.mxu0 0.0
  %303 = vmatprep.subr.mxu0 0.0
  %304 = vmatpush1.msra.mxu0 0.0
  %305 = vmatprep.subr.mxu0 0.0
  %306 = vmatpush1.msra.mxu0 0.0
  %307 = vmatprep.subr.mxu0 0.0
  %308 = vmatpush1.msra.mxu0 0.0
  %309 = vmatprep.subr.mxu0 0.0
  %310 = vmatpush1.msra.mxu0 0.0
  %311 = vmatprep.subr.mxu0 0.0
  %312 = vmatpush1.msra.mxu0 0.0
  %313 = vmatprep.subr.mxu0 0.0
  %314 = vmatpush1.msra.mxu0 0.0
  %315 = vmatprep.subr.mxu0 0.0
  %316 = vmatpush1.msra.mxu0 0.0
  %317 = vmatprep.subr.mxu0 0.0
  %318 = vmatpush1.msra.mxu0 0.0
  %319 = vmatprep.subr.mxu0 0.0
  %320 = vmatpush1.msra.mxu0 0.0
  %321 = vmatprep.subr.mxu0 0.0
  %322 = vmatpush1.msra.mxu0 0.0
  %323 = vmatprep.subr.mxu0 0.0
  %324 = vmatpush1.msra.mxu0 0.0
  %325 = vmatprep.subr.mxu0 0.0
  %326 = vmatpush1.msra.mxu0 0.0
  %327 = vmatprep.subr.mxu0 0.0
  %328 = vmatpush1.msra.mxu0 0.0
  %329 = vmatprep.subr.mxu0 0.0
  %330 = vmatpush1.msra.mxu0 0.0
  %331 = vmatprep.subr.mxu0 0.0
  %332 = vmatpush1.msra.mxu0 0.0
  %333 = vmatprep.subr.mxu0 0.0
  %334 = vmatpush1.msra.mxu0 0.0
  %335 = vmatprep.subr.mxu0 0.0
  %336 = vmatpush1.msra.mxu0 0.0
  %337 = vmatprep.mubr.f32.mxu0 0.0
  %338 = vmatmul.mubr.f32.gmra.mrb[0].mxu0 %v187
  %v339 = vpop.f32.mrb[0].mxu0
  %v340 = vadd.f32 %v269, %v339
  %v341 = vpop.f32.mrb[0].mxu0
  %v342 = vadd.f32 %v271, %v341
  %343 = vdwg.mxu0
  %344 = vmatprep.subr.mxu0 %v36
  %345 = vmatpush1.msra.mxu0 %v35
  %346 = vmatprep.subr.mxu0 %v40
  %347 = vmatpush1.msra.mxu0 %v39
  %348 = vmatprep.subr.mxu0 %v44
  %349 = vmatpush1.msra.mxu0 %v43
  %350 = vmatprep.subr.mxu0 %v48
  %351 = vmatpush1.msra.mxu0 %v47
  %352 = vmatprep.subr.mxu0 %v52
  %353 = vmatpush1.msra.mxu0 %v51
  %354 = vmatprep.subr.mxu0 %v56
  %355 = vmatpush1.msra.mxu0 %v55
  %356 = vmatprep.subr.mxu0 %v60
  %357 = vmatpush1.msra.mxu0 %v59
  %358 = vmatprep.subr.mxu0 %v64
  %359 = vmatpush1.msra.mxu0 %v63
  %360 = vmatprep.subr.mxu0 %v68
  %361 = vmatpush1.msra.mxu0 %v67
  %362 = vmatprep.subr.mxu0 %v72
  %363 = vmatpush1.msra.mxu0 %v71
  %364 = vmatprep.subr.mxu0 %v76
  %365 = vmatpush1.msra.mxu0 %v75
  %366 = vmatprep.subr.mxu0 %v80
  %367 = vmatpush1.msra.mxu0 %v79
  %368 = vmatprep.subr.mxu0 %v84
  %369 = vmatpush1.msra.mxu0 %v83
  %370 = vmatprep.subr.mxu0 %v88
  %371 = vmatpush1.msra.mxu0 %v87
  %372 = vmatprep.subr.mxu0 %v92
  %373 = vmatpush1.msra.mxu0 %v91
  %374 = vmatprep.subr.mxu0 %v96
  %375 = vmatpush1.msra.mxu0 %v95
  %376 = vmatprep.subr.mxu0 %v100
  %377 = vmatpush1.msra.mxu0 %v99
  %378 = vmatprep.subr.mxu0 %v104
  %379 = vmatpush1.msra.mxu0 %v103
  %380 = vmatprep.subr.mxu0 %v108
  %381 = vmatpush1.msra.mxu0 %v107
  %382 = vmatprep.subr.mxu0 %v112
  %383 = vmatpush1.msra.mxu0 %v111
  %384 = vmatprep.subr.mxu0 %v116
  %385 = vmatpush1.msra.mxu0 %v115
  %386 = vmatprep.subr.mxu0 %v120
  %387 = vmatpush1.msra.mxu0 %v119
  %388 = vmatprep.subr.mxu0 %v124
  %389 = vmatpush1.msra.mxu0 %v123
  %390 = vmatprep.subr.mxu0 %v128
  %391 = vmatpush1.msra.mxu0 %v127
  %392 = vmatprep.subr.mxu0 %v132
  %393 = vmatpush1.msra.mxu0 %v131
  %394 = vmatprep.subr.mxu0 %v136
  %395 = vmatpush1.msra.mxu0 %v135
  %396 = vmatprep.subr.mxu0 %v140
  %397 = vmatpush1.msra.mxu0 %v139
  %398 = vmatprep.subr.mxu0 %v144
  %399 = vmatpush1.msra.mxu0 %v143
  %400 = vmatprep.subr.mxu0 %v148
  %401 = vmatpush1.msra.mxu0 %v147
  %402 = vmatprep.subr.mxu0 %v152
  %403 = vmatpush1.msra.mxu0 %v151
  %404 = vmatprep.subr.mxu0 %v156
  %405 = vmatpush1.msra.mxu0 %v155
  %406 = vmatprep.subr.mxu0 %v160
  %407 = vmatpush1.msra.mxu0 %v159
  %408 = vmatprep.mubr.f32.mxu0 %v31
  %409 = vmatmul.mubr.f32.gmra.mrb[0].mxu0 %v30
  %v410 = vpop.f32.mrb[0].mxu0
  %v411 = vadd.f32 0.0, %v410
  %v412 = vpop.f32.mrb[0].mxu0
  %v413 = vadd.f32 0.0, %v412
  %414 = vdwg.mxu0
  %415 = vmatprep.subr.mxu0 %v164
  %416 = vmatpush1.msra.mxu0 %v163
  %417 = vmatprep.subr.mxu0 %v168
  %418 = vmatpush1.msra.mxu0 %v167
  %419 = vmatprep.subr.mxu0 %v172
  %420 = vmatpush1.msra.mxu0 %v171
  %421 = vmatprep.subr.mxu0 %v176
  %422 = vmatpush1.msra.mxu0 %v175
  %423 = vmatprep.subr.mxu0 %v180
  %424 = vmatpush1.msra.mxu0 %v179
  %425 = vmatprep.subr.mxu0 %v200
  %426 = vmatpush1.msra.mxu0 %v197
  %427 = vmatprep.subr.mxu0 0.0
  %428 = vmatpush1.msra.mxu0 0.0
  %429 = vmatprep.subr.mxu0 0.0
  %430 = vmatpush1.msra.mxu0 0.0
  %431 = vmatprep.subr.mxu0 0.0
  %432 = vmatpush1.msra.mxu0 0.0
  %433 = vmatprep.subr.mxu0 0.0
  %434 = vmatpush1.msra.mxu0 0.0
  %435 = vmatprep.subr.mxu0 0.0
  %436 = vmatpush1.msra.mxu0 0.0
  %437 = vmatprep.subr.mxu0 0.0
  %438 = vmatpush1.msra.mxu0 0.0
  %439 = vmatprep.subr.mxu0 0.0
  %440 = vmatpush1.msra.mxu0 0.0
  %441 = vmatprep.subr.mxu0 0.0
  %442 = vmatpush1.msra.mxu0 0.0
  %443 = vmatprep.subr.mxu0 0.0
  %444 = vmatpush1.msra.mxu0 0.0
  %445 = vmatprep.subr.mxu0 0.0
  %446 = vmatpush1.msra.mxu0 0.0
  %447 = vmatprep.subr.mxu0 0.0
  %448 = vmatpush1.msra.mxu0 0.0
  %449 = vmatprep.subr.mxu0 0.0
  %450 = vmatpush1.msra.mxu0 0.0
  %451 = vmatprep.subr.mxu0 0.0
  %452 = vmatpush1.msra.mxu0 0.0
  %453 = vmatprep.subr.mxu0 0.0
  %454 = vmatpush1.msra.mxu0 0.0
  %455 = vmatprep.subr.mxu0 0.0
  %456 = vmatpush1.msra.mxu0 0.0
  %457 = vmatprep.subr.mxu0 0.0
  %458 = vmatpush1.msra.mxu0 0.0
  %459 = vmatprep.subr.mxu0 0.0
  %460 = vmatpush1.msra.mxu0 0.0
  %461 = vmatprep.subr.mxu0 0.0
  %462 = vmatpush1.msra.mxu0 0.0
  %463 = vmatprep.subr.mxu0 0.0
  %464 = vmatpush1.msra.mxu0 0.0
  %465 = vmatprep.subr.mxu0 0.0
  %466 = vmatpush1.msra.mxu0 0.0
  %467 = vmatprep.subr.mxu0 0.0
  %468 = vmatpush1.msra.mxu0 0.0
  %469 = vmatprep.subr.mxu0 0.0
  %470 = vmatpush1.msra.mxu0 0.0
  %471 = vmatprep.subr.mxu0 0.0
  %472 = vmatpush1.msra.mxu0 0.0
  %473 = vmatprep.subr.mxu0 0.0
  %474 = vmatpush1.msra.mxu0 0.0
  %475 = vmatprep.subr.mxu0 0.0
  %476 = vmatpush1.msra.mxu0 0.0
  %477 = vmatprep.subr.mxu0 0.0
  %478 = vmatpush1.msra.mxu0 0.0
  %479 = vmatprep.mubr.f32.mxu0 0.0
  %480 = vmatmul.mubr.f32.gmra.mrb[0].mxu0 %v187
  %v481 = vpop.f32.mrb[0].mxu0
  %v482 = vadd.f32 %v411, %v481
  %v483 = vpop.f32.mrb[0].mxu0
  %v484 = vadd.f32 %v413, %v483
  %485 = vdwg.mxu0
  %v486 = vld [vmem:[%s2] sm:$0xf]
  %v488 = vlaneseq
  %v489 = vshrl.u32 %v488, 7
  %v490 = vsub.s32 0, %v489
  %v491 = vrot.slane %v486, %v490
  %v492 = vlaneseq
  %v493 = vshrl.u32 %v492, 7
  %v494 = vsub.s32 1, %v493
  %v495 = vrot.slane %v486, %v494
  %v496 = vlaneseq
  %v497 = vshrl.u32 %v496, 7
  %v498 = vsub.s32 2, %v497
  %v499 = vrot.slane %v486, %v498
  %v500 = vlaneseq
  %v501 = vshrl.u32 %v500, 7
  %v502 = vsub.s32 3, %v501
  %v503 = vrot.slane %v486, %v502
  %v508 = vmul.f32 %v340, %v491
  %v509 = vmul.f32 %v342, %v495
  %v510 = vmul.f32 %v482, %v499
  %v511 = vmul.f32 %v484, %v503
  %v512 = vld [vmem:[%s3] sm:$0xf]
  %v514 = vlaneseq
  %v515 = vshrl.u32 %v514, 7
  %v516 = vsub.s32 0, %v515
  %v517 = vrot.slane %v512, %v516
  %v518 = vlaneseq
  %v519 = vshrl.u32 %v518, 7
  %v520 = vsub.s32 1, %v519
  %v521 = vrot.slane %v512, %v520
  %v522 = vlaneseq
  %v523 = vshrl.u32 %v522, 7
  %v524 = vsub.s32 2, %v523
  %v525 = vrot.slane %v512, %v524
  %v526 = vlaneseq
  %v527 = vshrl.u32 %v526, 7
  %v528 = vsub.s32 3, %v527
  %v529 = vrot.slane %v512, %v528
  %v534 = vadd.f32 %v508, %v517
  %v535 = vadd.f32 %v509, %v521
  %v536 = vadd.f32 %v510, %v525
  %v537 = vadd.f32 %v511, %v529
  %v538 = vmax.f32 %v534, 0.0
  %v539 = vmax.f32 %v535, 0.0
  %v540 = vmax.f32 %v536, 0.0
  %v541 = vmax.f32 %v537, 0.0
  %v542 = vld [vmem:[%s4] sm:$0xff]
  %v543 = vld [vmem:[%s4 + $0x8] sm:$0xff]
  %v544 = vld [vmem:[%s4 + $0x10] sm:$0xff]
  %v545 = vld [vmem:[%s4 + $0x18] sm:$0xff]
  %v546 = vld [vmem:[%s4 + $0x20] sm:$0xff]
  %v547 = vld [vmem:[%s4 + $0x28] sm:$0xff]
  %v548 = vld [vmem:[%s4 + $0x30] sm:$0xff]
  %v549 = vld [vmem:[%s4 + $0x38] sm:$0xff]
  %v550 = vld [vmem:[%s4 + $0x40] sm:$0xff]
  %v551 = vld [vmem:[%s4 + $0x48] sm:$0xff]
  %v552 = vld [vmem:[%s4 + $0x50] sm:$0xff]
  %v553 = vld [vmem:[%s4 + $0x58] sm:$0xff]
  %v554 = vld [vmem:[%s4 + $0x60] sm:$0xff]
  %v555 = vld [vmem:[%s4 + $0x68] sm:$0xff]
  %v556 = vld [vmem:[%s4 + $0x70] sm:$0xff]
  %v557 = vld [vmem:[%s4 + $0x78] sm:$0xff]
  %v558 = vld [vmem:[%s4 + $0x80] sm:$0xff]
  %v559 = vld [vmem:[%s4 + $0x88] sm:$0xff]
  %v560 = vld [vmem:[%s4 + $0x90] sm:$0xff]
  %v561 = vld [vmem:[%s4 + $0x98] sm:$0xff]
  %v562 = vld [vmem:[%s4 + $0xa0] sm:$0xff]
  %v563 = vld [vmem:[%s4 + $0xa8] sm:$0xff]
  %v564 = vld [vmem:[%s4 + $0xb0] sm:$0xff]
  %v565 = vld [vmem:[%s4 + $0xb8] sm:$0xff]
  %v566 = vld [vmem:[%s4 + $0xc0] sm:$0xff]
  %v567 = vld [vmem:[%s4 + $0xc8] sm:$0xff]
  %v568 = vld [vmem:[%s4 + $0xd0] sm:$0xff]
  %v569 = vld [vmem:[%s4 + $0xd8] sm:$0xff]
  %v570 = vld [vmem:[%s4 + $0xe0] sm:$0xff]
  %v571 = vld [vmem:[%s4 + $0xe8] sm:$0xff]
  %v572 = vld [vmem:[%s4 + $0xf0] sm:$0xff]
  %v573 = vld [vmem:[%s4 + $0xf8] sm:$0xff]
  %v574 = vld [vmem:[%s4 + $0x100] sm:$0xff]
  %v575 = vld [vmem:[%s4 + $0x108] sm:$0xff]
  %v576 = vld [vmem:[%s4 + $0x110] sm:$0xff]
  %v577 = vld [vmem:[%s4 + $0x118] sm:$0xff]
  %v578 = vld [vmem:[%s4 + $0x120] sm:$0xff]
  %v579 = vld [vmem:[%s4 + $0x128] sm:$0xff]
  %v580 = vld [vmem:[%s4 + $0x130] sm:$0xff]
  %v581 = vld [vmem:[%s4 + $0x138] sm:$0xff]
  %v582 = vld [vmem:[%s4 + $0x140] sm:$0xff]
  %v583 = vld [vmem:[%s4 + $0x148] sm:$0xff]
  %v584 = vld [vmem:[%s4 + $0x150] sm:$0xff]
  %v585 = vld [vmem:[%s4 + $0x158] sm:$0xff]
  %v586 = vld [vmem:[%s4 + $0x160] sm:$0xff]
  %v587 = vld [vmem:[%s4 + $0x168] sm:$0xff]
  %v588 = vld [vmem:[%s4 + $0x170] sm:$0xff]
  %v589 = vld [vmem:[%s4 + $0x178] sm:$0xff]
  %v590 = vld [vmem:[%s4 + $0x180] sm:$0xff]
  %v591 = vld [vmem:[%s4 + $0x188] sm:$0xff]
  %v592 = vld [vmem:[%s4 + $0x190] sm:$0xff]
  %v593 = vld [vmem:[%s4 + $0x198] sm:$0xff]
  %v594 = vld [vmem:[%s4 + $0x1a0] sm:$0xff]
  %v595 = vld [vmem:[%s4 + $0x1a8] sm:$0xff]
  %v596 = vld [vmem:[%s4 + $0x1b0] sm:$0xff]
  %v597 = vld [vmem:[%s4 + $0x1b8] sm:$0xff]
  %v598 = vld [vmem:[%s4 + $0x1c0] sm:$0xff]
  %v599 = vld [vmem:[%s4 + $0x1c8] sm:$0xff]
  %v600 = vld [vmem:[%s4 + $0x1d0] sm:$0xff]
  %v601 = vld [vmem:[%s4 + $0x1d8] sm:$0xff]
  %v602 = vld [vmem:[%s4 + $0x1e0] sm:$0xff]
  %v603 = vld [vmem:[%s4 + $0x1e8] sm:$0xff]
  %v604 = vld [vmem:[%s4 + $0x1f0] sm:$0xff]
  %v605 = vld [vmem:[%s4 + $0x1f8] sm:$0xff]
  %606 = vmatprep.subr.mxu0 0.0
  %607 = vmatpush1.msra.mxu0 %v542
  %608 = vmatprep.subr.mxu0 0.0
  %609 = vmatpush1.msra.mxu0 %v543
  %610 = vmatprep.subr.mxu0 0.0
  %611 = vmatpush1.msra.mxu0 %v544
  %612 = vmatprep.subr.mxu0 0.0
  %613 = vmatpush1.msra.mxu0 %v545
  %614 = vmatprep.subr.mxu0 0.0
  %615 = vmatpush1.msra.mxu0 %v546
  %616 = vmatprep.subr.mxu0 0.0
  %617 = vmatpush1.msra.mxu0 %v547
  %618 = vmatprep.subr.mxu0 0.0
  %619 = vmatpush1.msra.mxu0 %v548
  %620 = vmatprep.subr.mxu0 0.0
  %621 = vmatpush1.msra.mxu0 %v549
  %622 = vmatprep.subr.mxu0 0.0
  %623 = vmatpush1.msra.mxu0 %v550
  %624 = vmatprep.subr.mxu0 0.0
  %625 = vmatpush1.msra.mxu0 %v551
  %626 = vmatprep.subr.mxu0 0.0
  %627 = vmatpush1.msra.mxu0 %v552
  %628 = vmatprep.subr.mxu0 0.0
  %629 = vmatpush1.msra.mxu0 %v553
  %630 = vmatprep.subr.mxu0 0.0
  %631 = vmatpush1.msra.mxu0 %v554
  %632 = vmatprep.subr.mxu0 0.0
  %633 = vmatpush1.msra.mxu0 %v555
  %634 = vmatprep.subr.mxu0 0.0
  %635 = vmatpush1.msra.mxu0 %v556
  %636 = vmatprep.subr.mxu0 0.0
  %637 = vmatpush1.msra.mxu0 %v557
  %638 = vmatprep.subr.mxu0 0.0
  %639 = vmatpush1.msra.mxu0 %v558
  %640 = vmatprep.subr.mxu0 0.0
  %641 = vmatpush1.msra.mxu0 %v559
  %642 = vmatprep.subr.mxu0 0.0
  %643 = vmatpush1.msra.mxu0 %v560
  %644 = vmatprep.subr.mxu0 0.0
  %645 = vmatpush1.msra.mxu0 %v561
  %646 = vmatprep.subr.mxu0 0.0
  %647 = vmatpush1.msra.mxu0 %v562
  %648 = vmatprep.subr.mxu0 0.0
  %649 = vmatpush1.msra.mxu0 %v563
  %650 = vmatprep.subr.mxu0 0.0
  %651 = vmatpush1.msra.mxu0 %v564
  %652 = vmatprep.subr.mxu0 0.0
  %653 = vmatpush1.msra.mxu0 %v565
  %654 = vmatprep.subr.mxu0 0.0
  %655 = vmatpush1.msra.mxu0 %v566
  %656 = vmatprep.subr.mxu0 0.0
  %657 = vmatpush1.msra.mxu0 %v567
  %658 = vmatprep.subr.mxu0 0.0
  %659 = vmatpush1.msra.mxu0 %v568
  %660 = vmatprep.subr.mxu0 0.0
  %661 = vmatpush1.msra.mxu0 %v569
  %662 = vmatprep.subr.mxu0 0.0
  %663 = vmatpush1.msra.mxu0 %v570
  %664 = vmatprep.subr.mxu0 0.0
  %665 = vmatpush1.msra.mxu0 %v571
  %666 = vmatprep.subr.mxu0 0.0
  %667 = vmatpush1.msra.mxu0 %v572
  %668 = vmatprep.subr.mxu0 0.0
  %669 = vmatpush1.msra.mxu0 %v573
  %670 = vmatprep.mubr.f32.mxu0 %v539
  %671 = vmatmul.mubr.f32.gmra.mrb[0].mxu0 %v538
  %v672 = vpop.f32.mrb[0].mxu0
  %v673 = vadd.f32 0.0, %v672
  %v674 = vpop.f32.mrb[0].mxu0
  %675 = vdwg.mxu0
  %676 = vmatprep.subr.mxu0 0.0
  %677 = vmatpush1.msra.mxu0 %v574
  %678 = vmatprep.subr.mxu0 0.0
  %679 = vmatpush1.msra.mxu0 %v575
  %680 = vmatprep.subr.mxu0 0.0
  %681 = vmatpush1.msra.mxu0 %v576
  %682 = vmatprep.subr.mxu0 0.0
  %683 = vmatpush1.msra.mxu0 %v577
  %684 = vmatprep.subr.mxu0 0.0
  %685 = vmatpush1.msra.mxu0 %v578
  %686 = vmatprep.subr.mxu0 0.0
  %687 = vmatpush1.msra.mxu0 %v579
  %688 = vmatprep.subr.mxu0 0.0
  %689 = vmatpush1.msra.mxu0 %v580
  %690 = vmatprep.subr.mxu0 0.0
  %691 = vmatpush1.msra.mxu0 %v581
  %692 = vmatprep.subr.mxu0 0.0
  %693 = vmatpush1.msra.mxu0 %v582
  %694 = vmatprep.subr.mxu0 0.0
  %695 = vmatpush1.msra.mxu0 %v583
  %696 = vmatprep.subr.mxu0 0.0
  %697 = vmatpush1.msra.mxu0 %v584
  %698 = vmatprep.subr.mxu0 0.0
  %699 = vmatpush1.msra.mxu0 %v585
  %700 = vmatprep.subr.mxu0 0.0
  %701 = vmatpush1.msra.mxu0 %v586
  %702 = vmatprep.subr.mxu0 0.0
  %703 = vmatpush1.msra.mxu0 %v587
  %704 = vmatprep.subr.mxu0 0.0
  %705 = vmatpush1.msra.mxu0 %v588
  %706 = vmatprep.subr.mxu0 0.0
  %707 = vmatpush1.msra.mxu0 %v589
  %708 = vmatprep.subr.mxu0 0.0
  %709 = vmatpush1.msra.mxu0 %v590
  %710 = vmatprep.subr.mxu0 0.0
  %711 = vmatpush1.msra.mxu0 %v591
  %712 = vmatprep.subr.mxu0 0.0
  %713 = vmatpush1.msra.mxu0 %v592
  %714 = vmatprep.subr.mxu0 0.0
  %715 = vmatpush1.msra.mxu0 %v593
  %716 = vmatprep.subr.mxu0 0.0
  %717 = vmatpush1.msra.mxu0 %v594
  %718 = vmatprep.subr.mxu0 0.0
  %719 = vmatpush1.msra.mxu0 %v595
  %720 = vmatprep.subr.mxu0 0.0
  %721 = vmatpush1.msra.mxu0 %v596
  %722 = vmatprep.subr.mxu0 0.0
  %723 = vmatpush1.msra.mxu0 %v597
  %724 = vmatprep.subr.mxu0 0.0
  %725 = vmatpush1.msra.mxu0 %v598
  %726 = vmatprep.subr.mxu0 0.0
  %727 = vmatpush1.msra.mxu0 %v599
  %728 = vmatprep.subr.mxu0 0.0
  %729 = vmatpush1.msra.mxu0 %v600
  %730 = vmatprep.subr.mxu0 0.0
  %731 = vmatpush1.msra.mxu0 %v601
  %732 = vmatprep.subr.mxu0 0.0
  %733 = vmatpush1.msra.mxu0 %v602
  %734 = vmatprep.subr.mxu0 0.0
  %735 = vmatpush1.msra.mxu0 %v603
  %736 = vmatprep.subr.mxu0 0.0
  %737 = vmatpush1.msra.mxu0 %v604
  %738 = vmatprep.subr.mxu0 0.0
  %739 = vmatpush1.msra.mxu0 %v605
  %740 = vmatprep.mubr.f32.mxu0 %v541
  %741 = vmatmul.mubr.f32.gmra.mrb[0].mxu0 %v540
  %v742 = vpop.f32.mrb[0].mxu0
  %v743 = vadd.f32 %v673, %v742
  %v744 = vpop.f32.mrb[0].mxu0
  %745 = vdwg.mxu0
  %vm746 = vcmask 261120
  %747 = vst.msk [vmem:[%s5] sm:$0xff] %vm746, %v743
  %v748 = vld [vmem:[#allocation2] sm:$0x1]
  %v749 = vsel %vm746, %v743, 0.0
  %v750 = vrot.slane %v749, 4
  %v751 = vadd.f32 %v749, %v750
  %v752 = vrot.slane %v751, 2
  %v753 = vadd.f32 %v751, %v752
  %v754 = vrot.slane %v753, 1
  %v755 = vadd.f32 %v753, %v754
  %v756 = vadd.f32 %v748, %v755
  %vm757 = vcmask 253952
  %758 = vst.msk [vmem:[#allocation2] sm:$0x1] %vm757, %v756
  %v759 = vld [vmem:[#allocation3] sm:$0x1]
  %v760 = vmul.f32 %v743, %v743
  %v761 = vsel %vm746, %v760, 0.0
  %v762 = vrot.slane %v761, 4
  %v763 = vadd.f32 %v761, %v762
  %v764 = vrot.slane %v763, 2
  %v765 = vadd.f32 %v763, %v764
  %v766 = vrot.slane %v765, 1
  %v767 = vadd.f32 %v765, %v766
  %v768 = vadd.f32 %v759, %v767
  %769 = vst.msk [vmem:[#allocation3] sm:$0x1] %vm757, %v768
  // Predicated region
  $region26: #{textnet_forward.4} parent=0 // pred_check
    %p770 = pneg %p23
  $region27: #{textnet_forward.4} parent=0 // pred_check_branch
    %772 = sbr.rel (%p770) target = $region29
  $region28: #{textnet_forward.4} parent=0 // pred_region
    %v773 = vld [vmem:[#allocation2] sm:$0x1]
    %774 = vst.msk [vmem:[%s6] sm:$0x1] %vm757, %v773
    %v775 = vld [vmem:[#allocation3] sm:$0x1]
    %776 = vst.msk [vmem:[%s7] sm:$0x1] %vm757, %v775
  $region29: #{textnet_forward.4} parent=0 // pred_fallthru
    _
  // Predicated region
  $region30: #{textnet_forward.4} parent=0 // pred_check
    _
  $region31: #{textnet_forward.4} parent=0 // pred_check_branch
    %778 = sbr.rel (0) target = $region33
  $region32: #{textnet_forward.4} parent=0 // pred_region
    _
  $region33: #{textnet_forward.4} parent=0 // pred_fallthru
    _
  // Predicated region
  $region34: #{textnet_forward.4} parent=0 // pred_check
    _
  $region35: #{textnet_forward.4} parent=0 // pred_check_branch
    %780 = sbr.rel (0) target = $region37
  $region36: #{textnet_forward.4} parent=0 // pred_region
    _
  $region37: #{textnet_forward.4} parent=0 // pred_fallthru
    _
  // Predicated region
  $region38: #{textnet_forward.4} parent=0 // pred_check
    _
  $region39: #{textnet_forward.4} parent=0 // pred_check_branch
    %782 = sbr.rel (0) target = $region41
  $region40: #{textnet_forward.4} parent=0 // pred_region
    _
  $region41: #{textnet_forward.4} parent=0 // pred_fallthru
    _
  // Predicated region
  $region42: #{textnet_forward.4} parent=0 // pred_check
    _
  $region43: #{textnet_forward.4} parent=0 // pred_check_branch
    %784 = sbr.rel (0) target = $region45
  $region44: #{textnet_forward.4} parent=0 // pred_region
    _
  $region45: #{textnet_forward.4} parent=0 // pred_fallthru
    _
  // Predicated region
  $region46: #{textnet_forward.4} parent=0 // pred_check
    _
  $region47: #{textnet_forward.4} parent=0 // pred_check_branch
    %786 = sbr.rel (0) target = $region49
  $region48: #{textnet_forward.4} parent=0 // pred_region
    _
  $region49: #{textnet_forward.4} parent=0 // pred_fallthru
    _
  // Predicated region
  $region50: #{textnet_forward.4} parent=0 // pred_check
    _
  $region51: #{textnet_forward.4} parent=0 // pred_check_branch
    %788 = sbr.rel (0) target = $region53
  $region52: #{textnet_forward.4} parent=0 // pred_region
    _
  $region53: #{textnet_forward.4} parent=0 // pred_fallthru
    _

</llo_original>
